<compile_context>
chip_gen: v7x
topology: tpu7x:2x2x1
jax: 0.10.0
libtpu: 0.0.40
codegen_flags: <defaults>
</compile_context>

<pallas_src>
import jax
import jax.numpy as jnp
from jax import lax
from jax.experimental import pallas as pl
from jax.experimental.pallas import tpu as pltpu

O_PAD = 128   # lane-dense output width for the kernel-side store


def lstm_reg_kernel(x_ref,       # (T*BP, I)    bf16, rows = t*BP + b
                    w0x_ref,     # (I, 4H)      bf16  W_ih_l0^T  (gate cols [f,i,o,g])
                    w0h_ref,     # (H, 4H)      bf16  W_hh_l0^T
                    b0_ref,      # (1, 4H)      f32   b_ih_l0 + b_hh_l0
                    w1x_ref,     # (H, 4H)      bf16  W_ih_l1^T
                    w1h_ref,     # (H, 4H)      bf16  W_hh_l1^T
                    b1_ref,      # (1, 4H)      f32   b_ih_l1 + b_hh_l1
                    wreg_ref,    # (H, O_PAD)   bf16  W_reg^T zero-padded to 128 lanes
                    breg_ref,    # (1, O_PAD)   f32
                    out_ref,     # (T*BP, O_PAD) f32
                    h0_sc, c0_sc, h1_sc, c1_sc,   # (BP, H) f32 persistent state
                    xg_sc,       # (T*BP, 4H) f32  layer-0 input projection (staged)
                    h1acc_sc):   # (T*BP, H)  f32  per-step layer-1 outputs
    chunk = pl.program_id(0)
    BP, H = h0_sc.shape
    TB = x_ref.shape[0]
    T = TB // BP
    G = 4 * H
    bf16 = jnp.bfloat16

    @pl.when(chunk == 0)
    def _():
        h0_sc[...] = jnp.zeros_like(h0_sc)
        c0_sc[...] = jnp.zeros_like(c0_sc)
        h1_sc[...] = jnp.zeros_like(h1_sc)
        c1_sc[...] = jnp.zeros_like(c1_sc)

    # Layer-0 input projection for the whole chunk in ONE bf16 MXU matmul (bias
    # folded in), staged in VMEM so the time loop reads aligned (BP, 4H) slices.
    xg_sc[...] = jnp.dot(x_ref[...], w0x_ref[...],
                         preferred_element_type=jnp.float32) + b0_ref[...]

    # Loop-invariant weights / broadcasts hoisted out of the time loop.
    w0h = w0h_ref[...]
    w1x = w1x_ref[...]
    w1h = w1h_ref[...]
    b1b = jnp.broadcast_to(b1_ref[...], (BP, G))   # hoisted: JAX does not CSE this

    def activations(gates, c):
        # Gate columns packed [f, i, o, g]: one sigmoid over (BP, 3H), one tanh
        # over (BP, H); f sits in lanes 0:H, aligned with c (f*c first on the chain).
        acts = jax.nn.sigmoid(gates[:, :3 * H])
        g = jnp.tanh(gates[:, 3 * H:])
        f_g = acts[:, :H]
        i_g = acts[:, H:2 * H]
        o_g = acts[:, 2 * H:3 * H]
        c_new = f_g * c + i_g * g
        h_new = o_g * jnp.tanh(c_new)
        return h_new, c_new

    def step(t, carry):
        h0, c0, h1, c1 = carry
        off = pl.multiple_of(t * BP, BP)
        # Layer-1 hidden-state matmul first: depends only on the PREVIOUS h1, so it
        # runs off the act0 -> act1 critical path (no per-step concat any more).
        hh1 = jnp.dot(h1.astype(bf16), w1h, preferred_element_type=jnp.float32)
        # Layer 0: precomputed input gates + a single (BP,H)x(H,4H) matmul.
        g0 = xg_sc[pl.ds(off, BP), :] + jnp.dot(h0.astype(bf16), w0h,
                                                preferred_element_type=jnp.float32)
        h0, c0 = activations(g0, c0)
        # Layer 1: add the new-h0 contribution.
        g1 = hh1 + jnp.dot(h0.astype(bf16), w1x,
                           preferred_element_type=jnp.float32) + b1b
        h1, c1 = activations(g1, c1)
        h1acc_sc[pl.ds(off, BP), :] = h1          # scratch-backed accumulation
        return h0, c0, h1, c1

    h0, c0, h1, c1 = lax.fori_loop(
        0, T, step,
        (h0_sc[...], c0_sc[...], h1_sc[...], c1_sc[...]),
        unroll=True)

    # Carry state to the next chunk.
    h0_sc[...] = h0
    c0_sc[...] = c0
    h1_sc[...] = h1
    c1_sc[...] = c1

    # Batched regression head: one (T*BP, H)x(H, O_PAD) matmul + one lane-dense store.
    y = jnp.dot(h1acc_sc[...].astype(bf16), wreg_ref[...],
                preferred_element_type=jnp.float32) + breg_ref[...]
    out_ref[...] = y.astype(out_ref.dtype)


def prepare_params(params, *, o_pad=O_PAD):
    """One-time host-side weight prep (do this at parameter-load time, NOT per call):
    transpose, repack gate rows [i,f,g,o] -> [f,i,o,g], fuse the two biases, pad the
    head to a lane-dense width, cast MXU operands to bf16."""
    wih0, whh0, bih0, bhh0, wih1, whh1, bih1, bhh1, wreg, breg = params
    H = whh0.shape[1]
    O = wreg.shape[0]
    bf16 = jnp.bfloat16

    def reorder(w):   # rows [i, f, g, o] (PyTorch) -> [f, i, o, g]
        i, f, g, o = jnp.split(w, 4, axis=0)
        return jnp.concatenate([f, i, o, g], axis=0)

    w0x = reorder(wih0).T.astype(bf16)                            # (I, 4H)
    w0h = reorder(whh0).T.astype(bf16)                            # (H, 4H)
    b0 = reorder((bih0 + bhh0)[:, None]).T.astype(jnp.float32)    # (1, 4H)
    w1x = reorder(wih1).T.astype(bf16)                            # (H, 4H)
    w1h = reorder(whh1).T.astype(bf16)                            # (H, 4H)
    b1 = reorder((bih1 + bhh1)[:, None]).T.astype(jnp.float32)    # (1, 4H)
    wreg_p = jnp.zeros((H, o_pad), jnp.float32).at[:, :O].set(wreg.T).astype(bf16)
    breg_p = jnp.zeros((1, o_pad), jnp.float32).at[0, :O].set(breg)
    return (w0x, w0h, b0, w1x, w1h, b1, wreg_p, breg_p), O


def lstm_reg_forward(x, prepared, *, t_chunk=8):
    """x: (S, B, I) float32; prepared = prepare_params(pytorch_params).
    Returns (S, B, O) float32 — same semantics as the nn.Module forward."""
    weights, O = prepared
    w0x, w0h, b0, w1x, w1h, b1, wreg_p, breg_p = weights
    S, B, I = x.shape
    H = w0h.shape[0]
    G = 4 * H
    OP = wreg_p.shape[1]

    # Pad batch to a sublane multiple (8) and seq to a chunk multiple; padded
    # rows/steps are computed independently and sliced off.
    T = max(1, min(t_chunk, S))
    BP = ((B + 7) // 8) * 8
    SP = ((S + T - 1) // T) * T
    xp = jnp.zeros((SP, BP, I), jnp.bfloat16).at[:S, :B, :].set(x.astype(jnp.bfloat16))
    xp = xp.reshape(SP * BP, I)              # row index = t * BP + b (time-major)
    n_chunks = SP // T
    TB = T * BP

    full = lambda i: (0, 0)                  # loop-invariant blocks stay VMEM-resident
    # TODO(synk): pipeline_mode=pl.Buffered(1) on the weight specs + a leading
    # "parallel" batch-block grid axis (v7x 2nd TC) when H / BP are scaled up.
    out_flat = pl.pallas_call(
        lstm_reg_kernel,
        out_shape=jax.ShapeDtypeStruct((SP * BP, OP), jnp.float32),
        grid_spec=pltpu.PrefetchScalarGridSpec(
            num_scalar_prefetch=0,
            grid=(n_chunks,),
            in_specs=[
                pl.BlockSpec((TB, I), lambda i: (i, 0)),   # x chunk
                pl.BlockSpec((I, G), full),                # W_ih_l0^T
                pl.BlockSpec((H, G), full),                # W_hh_l0^T
                pl.BlockSpec((1, G), full),                # b_l0
                pl.BlockSpec((H, G), full),                # W_ih_l1^T
                pl.BlockSpec((H, G), full),                # W_hh_l1^T
                pl.BlockSpec((1, G), full),                # b_l1
                pl.BlockSpec((H, OP), full),               # W_reg^T (lane-padded)
                pl.BlockSpec((1, OP), full),               # b_reg (lane-padded)
            ],
            out_specs=pl.BlockSpec((TB, OP), lambda i: (i, 0)),
            scratch_shapes=[pltpu.VMEM((BP, H), jnp.float32)] * 4    # h0, c0, h1, c1
                          + [pltpu.VMEM((TB, G), jnp.float32),       # xg staging
                             pltpu.VMEM((TB, H), jnp.float32)],      # h1 per-step acc
        ),
        compiler_params=pltpu.CompilerParams(
            # Recurrence over time: must stay sequential ("arbitrary"), never "parallel".
            dimension_semantics=("arbitrary",),
            vmem_limit_bytes=32 * 1024 * 1024,
        ),
    )(xp, w0x, w0h, b0, w1x, w1h, b1, wreg_p, breg_p)

    out = out_flat.reshape(SP, BP, OP)
    return out[:S, :B, :O]


def init_params(key, input_size, hidden_size, output_size):
    """PyTorch-layout parameters (gate rows [i,f,g,o]), uniform +-1/sqrt(H)."""
    H = hidden_size
    k = 1.0 / jnp.sqrt(jnp.float32(H))
    ks = jax.random.split(key, 10)
    u = lambda kk, shape: jax.random.uniform(kk, shape, jnp.float32, -k, k)
    wih0 = u(ks[0], (4 * H, input_size))
    whh0 = u(ks[1], (4 * H, H))
    bih0 = u(ks[2], (4 * H,))
    bhh0 = u(ks[3], (4 * H,))
    wih1 = u(ks[4], (4 * H, H))
    whh1 = u(ks[5], (4 * H, H))
    bih1 = u(ks[6], (4 * H,))
    bhh1 = u(ks[7], (4 * H,))
    wreg = u(ks[8], (output_size, H))
    breg = u(ks[9], (output_size,))
    return (wih0, whh0, bih0, bhh0, wih1, whh1, bih1, bhh1, wreg, breg)


def reference_forward(x, params):
    """Pure-JAX f32 replica of the PyTorch module (nn.LSTM 2 layers + nn.Linear)."""
    wih0, whh0, bih0, bhh0, wih1, whh1, bih1, bhh1, wreg, breg = params
    H = whh0.shape[1]

    def cell(x_in, h, c, wih, whh, bih, bhh):
        gt = x_in @ wih.T + h @ whh.T + bih + bhh
        i = jax.nn.sigmoid(gt[:, :H])
        f = jax.nn.sigmoid(gt[:, H:2 * H])
        g = jnp.tanh(gt[:, 2 * H:3 * H])
        o = jax.nn.sigmoid(gt[:, 3 * H:])
        c_new = f * c + i * g
        return o * jnp.tanh(c_new), c_new

    def step(carry, x_t):
        h0, c0, h1, c1 = carry
        h0, c0 = cell(x_t, h0, c0, wih0, whh0, bih0, bhh0)
        h1, c1 = cell(h0, h1, c1, wih1, whh1, bih1, bhh1)
        y = h1 @ wreg.T + breg
        return (h0, c0, h1, c1), y

    B = x.shape[1]
    z = jnp.zeros((B, H), jnp.float32)
    _, ys = jax.lax.scan(step, (z, z, z, z), x)
    return ys


if __name__ == "__main__":
    SEQ, BATCH, INPUT, HIDDEN, OUTPUT = 16, 2, 4, 32, 1

    key = jax.random.PRNGKey(0)
    kx, kp = jax.random.split(key)
    x = jax.random.normal(kx, (SEQ, BATCH, INPUT), jnp.float32)
    params = init_params(kp, INPUT, HIDDEN, OUTPUT)

    prepared = prepare_params(params)        # one-time weight prep, outside the forward
    fwd = jax.jit(lambda xx: lstm_reg_forward(xx, prepared, t_chunk=8))

    out = jax.block_until_ready(fwd(x))
    ref = jax.block_until_ready(reference_forward(x, params))

    assert out.shape == (SEQ, BATCH, OUTPUT)
    # bf16 MXU operands -> loosened tolerance vs. the f32 reference.
    assert jnp.allclose(out, ref, atol=2e-2, rtol=2e-2), "mismatch vs JAX reference"

    print("KERNEL_OK")
</pallas_src>

<mosaic_0001>
module attributes {stable_mosaic.version = 11 : i64} {
  func.func @lstm_reg_kernel(%arg0: i32, %arg1: memref<64x4xbf16, #tpu.memory_space<vmem>>, %arg2: memref<4x128xbf16, #tpu.memory_space<vmem>>, %arg3: memref<32x128xbf16, #tpu.memory_space<vmem>>, %arg4: memref<1x128xf32, #tpu.memory_space<vmem>>, %arg5: memref<32x128xbf16, #tpu.memory_space<vmem>>, %arg6: memref<32x128xbf16, #tpu.memory_space<vmem>>, %arg7: memref<1x128xf32, #tpu.memory_space<vmem>>, %arg8: memref<32x128xbf16, #tpu.memory_space<vmem>>, %arg9: memref<1x128xf32, #tpu.memory_space<vmem>>, %arg10: memref<64x128xf32, #tpu.memory_space<vmem>>, %arg11: memref<8x32xf32, #tpu.memory_space<vmem>>, %arg12: memref<8x32xf32, #tpu.memory_space<vmem>>, %arg13: memref<8x32xf32, #tpu.memory_space<vmem>>, %arg14: memref<8x32xf32, #tpu.memory_space<vmem>>, %arg15: memref<64x128xf32, #tpu.memory_space<vmem>>, %arg16: memref<64x32xf32, #tpu.memory_space<vmem>>) attributes {dimension_semantics = [#tpu.dimension_semantics<arbitrary>], iteration_bounds = array<i64: 2>, scalar_prefetch = 0 : i64, scratch_operands = 6 : i64, tpu.core_type = #tpu.core_type<tc>, window_params = [{transform_indices = @transform_0, window_bounds = array<i64: 64, 4>}, {pipeline_mode = #tpu.pipeline_mode<synchronous>, transform_indices = @transform_1, window_bounds = array<i64: 4, 128>}, {pipeline_mode = #tpu.pipeline_mode<synchronous>, transform_indices = @transform_2, window_bounds = array<i64: 32, 128>}, {pipeline_mode = #tpu.pipeline_mode<synchronous>, transform_indices = @transform_3, window_bounds = array<i64: 1, 128>}, {pipeline_mode = #tpu.pipeline_mode<synchronous>, transform_indices = @transform_4, window_bounds = array<i64: 32, 128>}, {pipeline_mode = #tpu.pipeline_mode<synchronous>, transform_indices = @transform_5, window_bounds = array<i64: 32, 128>}, {pipeline_mode = #tpu.pipeline_mode<synchronous>, transform_indices = @transform_6, window_bounds = array<i64: 1, 128>}, {pipeline_mode = #tpu.pipeline_mode<synchronous>, transform_indices = @transform_7, window_bounds = array<i64: 32, 128>}, {pipeline_mode = #tpu.pipeline_mode<synchronous>, transform_indices = @transform_8, window_bounds = array<i64: 1, 128>}, {transform_indices = @transform_9, window_bounds = array<i64: 64, 128>}]} {
    %c0_i32 = arith.constant 0 : i32
    %0 = arith.cmpi eq, %arg0, %c0_i32 : i32
    %1 = arith.extui %0 : i1 to i32
    %c0_i32_0 = arith.constant 0 : i32
    %2 = arith.cmpi ne, %1, %c0_i32_0 : i32
    scf.if %2 {
      %cst_106 = arith.constant 0.000000e+00 : f32
      %408 = vector.broadcast %cst_106 : f32 to vector<8x32xf32>
      %c0_107 = arith.constant 0 : index
      %c0_108 = arith.constant 0 : index
      %409 = vector.load %arg11[%c0_107, %c0_108] : memref<8x32xf32, #tpu.memory_space<vmem>>, vector<8x32xf32>
      tpu.vector_store %arg11[%c0_107, %c0_108], %408 {strides = array<i32>} : memref<8x32xf32, #tpu.memory_space<vmem>>, vector<8x32xf32>,
      %cst_109 = arith.constant 0.000000e+00 : f32
      %410 = vector.broadcast %cst_109 : f32 to vector<8x32xf32>
      %c0_110 = arith.constant 0 : index
      %c0_111 = arith.constant 0 : index
      %411 = vector.load %arg12[%c0_110, %c0_111] : memref<8x32xf32, #tpu.memory_space<vmem>>, vector<8x32xf32>
      tpu.vector_store %arg12[%c0_110, %c0_111], %410 {strides = array<i32>} : memref<8x32xf32, #tpu.memory_space<vmem>>, vector<8x32xf32>,
      %cst_112 = arith.constant 0.000000e+00 : f32
      %412 = vector.broadcast %cst_112 : f32 to vector<8x32xf32>
      %c0_113 = arith.constant 0 : index
      %c0_114 = arith.constant 0 : index
      %413 = vector.load %arg13[%c0_113, %c0_114] : memref<8x32xf32, #tpu.memory_space<vmem>>, vector<8x32xf32>
      tpu.vector_store %arg13[%c0_113, %c0_114], %412 {strides = array<i32>} : memref<8x32xf32, #tpu.memory_space<vmem>>, vector<8x32xf32>,
      %cst_115 = arith.constant 0.000000e+00 : f32
      %414 = vector.broadcast %cst_115 : f32 to vector<8x32xf32>
      %c0_116 = arith.constant 0 : index
      %c0_117 = arith.constant 0 : index
      %415 = vector.load %arg14[%c0_116, %c0_117] : memref<8x32xf32, #tpu.memory_space<vmem>>, vector<8x32xf32>
      tpu.vector_store %arg14[%c0_116, %c0_117], %414 {strides = array<i32>} : memref<8x32xf32, #tpu.memory_space<vmem>>, vector<8x32xf32>,
    } else {
    }
    %c0 = arith.constant 0 : index
    %c0_1 = arith.constant 0 : index
    %3 = vector.load %arg1[%c0, %c0_1] : memref<64x4xbf16, #tpu.memory_space<vmem>>, vector<64x4xbf16>
    %c0_2 = arith.constant 0 : index
    %c0_3 = arith.constant 0 : index
    %4 = vector.load %arg2[%c0_2, %c0_3] : memref<4x128xbf16, #tpu.memory_space<vmem>>, vector<4x128xbf16>
    %cst = arith.constant dense<0.000000e+00> : vector<64x128xf32>
    %5 = tpu.matmul %3, %4, %cst {dimension_numbers = #tpu.dot_dimension_numbers<[1], [0], [0], [1], [0, 0, 1, 1], [], []>} : vector<64x4xbf16>, vector<4x128xbf16>, vector<64x128xf32> -> vector<64x128xf32>
    %c0_4 = arith.constant 0 : index
    %c0_5 = arith.constant 0 : index
    %6 = vector.load %arg4[%c0_4, %c0_5] : memref<1x128xf32, #tpu.memory_space<vmem>>, vector<1x128xf32>
    %7 = vector.broadcast %6 : vector<1x128xf32> to vector<64x128xf32>
    %8 = arith.addf %5, %7 : vector<64x128xf32>
    %c0_6 = arith.constant 0 : index
    %c0_7 = arith.constant 0 : index
    %9 = vector.load %arg15[%c0_6, %c0_7] : memref<64x128xf32, #tpu.memory_space<vmem>>, vector<64x128xf32>
    tpu.vector_store %arg15[%c0_6, %c0_7], %8 {strides = array<i32>} : memref<64x128xf32, #tpu.memory_space<vmem>>, vector<64x128xf32>,
    %c0_8 = arith.constant 0 : index
    %c0_9 = arith.constant 0 : index
    %10 = vector.load %arg3[%c0_8, %c0_9] : memref<32x128xbf16, #tpu.memory_space<vmem>>, vector<32x128xbf16>
    %c0_10 = arith.constant 0 : index
    %c0_11 = arith.constant 0 : index
    %11 = vector.load %arg5[%c0_10, %c0_11] : memref<32x128xbf16, #tpu.memory_space<vmem>>, vector<32x128xbf16>
    %c0_12 = arith.constant 0 : index
    %c0_13 = arith.constant 0 : index
    %12 = vector.load %arg6[%c0_12, %c0_13] : memref<32x128xbf16, #tpu.memory_space<vmem>>, vector<32x128xbf16>
    %c0_14 = arith.constant 0 : index
    %c0_15 = arith.constant 0 : index
    %13 = vector.load %arg7[%c0_14, %c0_15] : memref<1x128xf32, #tpu.memory_space<vmem>>, vector<1x128xf32>
    %14 = vector.shape_cast %13 : vector<1x128xf32> to vector<1x128xf32>
    %15 = vector.broadcast %14 : vector<1x128xf32> to vector<8x128xf32>
    %c0_16 = arith.constant 0 : index
    %c0_17 = arith.constant 0 : index
    %16 = vector.load %arg11[%c0_16, %c0_17] : memref<8x32xf32, #tpu.memory_space<vmem>>, vector<8x32xf32>
    %c0_18 = arith.constant 0 : index
    %c0_19 = arith.constant 0 : index
    %17 = vector.load %arg12[%c0_18, %c0_19] : memref<8x32xf32, #tpu.memory_space<vmem>>, vector<8x32xf32>
    %c0_20 = arith.constant 0 : index
    %c0_21 = arith.constant 0 : index
    %18 = vector.load %arg13[%c0_20, %c0_21] : memref<8x32xf32, #tpu.memory_space<vmem>>, vector<8x32xf32>
    %c0_22 = arith.constant 0 : index
    %c0_23 = arith.constant 0 : index
    %19 = vector.load %arg14[%c0_22, %c0_23] : memref<8x32xf32, #tpu.memory_space<vmem>>, vector<8x32xf32>
    %c0_i32_24 = arith.constant 0 : i32
    %c8_i32 = arith.constant 8 : i32
    %20 = arith.muli %c0_i32_24, %c8_i32 : i32
    %21 = tpu.assume_multiple %20, 8 : i32
    %22 = arith.truncf %18 : vector<8x32xf32> to vector<8x32xbf16>
    %cst_25 = arith.constant dense<0.000000e+00> : vector<8x128xf32>
    %23 = tpu.matmul %22, %12, %cst_25 {dimension_numbers = #tpu.dot_dimension_numbers<[1], [0], [0], [1], [0, 0, 1, 1], [], []>} : vector<8x32xbf16>, vector<32x128xbf16>, vector<8x128xf32> -> vector<8x128xf32>
    %24 = arith.index_cast %21 : i32 to index
    %c0_26 = arith.constant 0 : index
    %25 = vector.load %arg15[%24, %c0_26] : memref<64x128xf32, #tpu.memory_space<vmem>>, vector<8x128xf32>
    %26 = arith.truncf %16 : vector<8x32xf32> to vector<8x32xbf16>
    %cst_27 = arith.constant dense<0.000000e+00> : vector<8x128xf32>
    %27 = tpu.matmul %26, %10, %cst_27 {dimension_numbers = #tpu.dot_dimension_numbers<[1], [0], [0], [1], [0, 0, 1, 1], [], []>} : vector<8x32xbf16>, vector<32x128xbf16>, vector<8x128xf32> -> vector<8x128xf32>
    %28 = arith.addf %25, %27 : vector<8x128xf32>
    %29 = vector.extract_strided_slice %28 {offsets = [0, 0], sizes = [8, 96], strides = [1, 1]} : vector<8x128xf32> to vector<8x96xf32>
    %30 = arith.negf %29 : vector<8x96xf32>
    %31 = math.exp %30 : vector<8x96xf32>
    %cst_28 = arith.constant 1.000000e+00 : f32
    %32 = vector.broadcast %cst_28 : f32 to vector<8x96xf32>
    %33 = arith.addf %32, %31 : vector<8x96xf32>
    %34 = arith.divf %32, %33 : vector<8x96xf32>
    %35 = vector.extract_strided_slice %28 {offsets = [0, 96], sizes = [8, 32], strides = [1, 1]} : vector<8x128xf32> to vector<8x32xf32>
    %36 = math.tanh %35 : vector<8x32xf32>
    %37 = vector.extract_strided_slice %34 {offsets = [0, 0], sizes = [8, 32], strides = [1, 1]} : vector<8x96xf32> to vector<8x32xf32>
    %38 = vector.extract_strided_slice %34 {offsets = [0, 32], sizes = [8, 32], strides = [1, 1]} : vector<8x96xf32> to vector<8x32xf32>
    %39 = vector.extract_strided_slice %34 {offsets = [0, 64], sizes = [8, 32], strides = [1, 1]} : vector<8x96xf32> to vector<8x32xf32>
    %40 = arith.mulf %37, %17 : vector<8x32xf32>
    %41 = arith.mulf %38, %36 : vector<8x32xf32>
    %42 = arith.addf %40, %41 : vector<8x32xf32>
    %43 = math.tanh %42 : vector<8x32xf32>
    %44 = arith.mulf %39, %43 : vector<8x32xf32>
    %45 = arith.truncf %44 : vector<8x32xf32> to vector<8x32xbf16>
    %cst_29 = arith.constant dense<0.000000e+00> : vector<8x128xf32>
    %46 = tpu.matmul %45, %11, %cst_29 {dimension_numbers = #tpu.dot_dimension_numbers<[1], [0], [0], [1], [0, 0, 1, 1], [], []>} : vector<8x32xbf16>, vector<32x128xbf16>, vector<8x128xf32> -> vector<8x128xf32>
    %47 = arith.addf %23, %46 : vector<8x128xf32>
    %48 = arith.addf %47, %15 : vector<8x128xf32>
    %49 = vector.extract_strided_slice %48 {offsets = [0, 0], sizes = [8, 96], strides = [1, 1]} : vector<8x128xf32> to vector<8x96xf32>
    %50 = arith.negf %49 : vector<8x96xf32>
    %51 = math.exp %50 : vector<8x96xf32>
    %cst_30 = arith.constant 1.000000e+00 : f32
    %52 = vector.broadcast %cst_30 : f32 to vector<8x96xf32>
    %53 = arith.addf %52, %51 : vector<8x96xf32>
    %54 = arith.divf %52, %53 : vector<8x96xf32>
    %55 = vector.extract_strided_slice %48 {offsets = [0, 96], sizes = [8, 32], strides = [1, 1]} : vector<8x128xf32> to vector<8x32xf32>
    %56 = math.tanh %55 : vector<8x32xf32>
    %57 = vector.extract_strided_slice %54 {offsets = [0, 0], sizes = [8, 32], strides = [1, 1]} : vector<8x96xf32> to vector<8x32xf32>
    %58 = vector.extract_strided_slice %54 {offsets = [0, 32], sizes = [8, 32], strides = [1, 1]} : vector<8x96xf32> to vector<8x32xf32>
    %59 = vector.extract_strided_slice %54 {offsets = [0, 64], sizes = [8, 32], strides = [1, 1]} : vector<8x96xf32> to vector<8x32xf32>
    %60 = arith.mulf %57, %19 : vector<8x32xf32>
    %61 = arith.mulf %58, %56 : vector<8x32xf32>
    %62 = arith.addf %60, %61 : vector<8x32xf32>
    %63 = math.tanh %62 : vector<8x32xf32>
    %64 = arith.mulf %59, %63 : vector<8x32xf32>
    %65 = arith.index_cast %21 : i32 to index
    %c0_31 = arith.constant 0 : index
    %66 = vector.load %arg16[%65, %c0_31] : memref<64x32xf32, #tpu.memory_space<vmem>>, vector<8x32xf32>
    tpu.vector_store %arg16[%65, %c0_31], %64 {strides = array<i32>} : memref<64x32xf32, #tpu.memory_space<vmem>>, vector<8x32xf32>,
    %c1_i32 = arith.constant 1 : i32
    %c8_i32_32 = arith.constant 8 : i32
    %67 = arith.muli %c1_i32, %c8_i32_32 : i32
    %68 = tpu.assume_multiple %67, 8 : i32
    %69 = arith.truncf %64 : vector<8x32xf32> to vector<8x32xbf16>
    %cst_33 = arith.constant dense<0.000000e+00> : vector<8x128xf32>
    %70 = tpu.matmul %69, %12, %cst_33 {dimension_numbers = #tpu.dot_dimension_numbers<[1], [0], [0], [1], [0, 0, 1, 1], [], []>} : vector<8x32xbf16>, vector<32x128xbf16>, vector<8x128xf32> -> vector<8x128xf32>
    %71 = arith.index_cast %68 : i32 to index
    %c0_34 = arith.constant 0 : index
    %72 = vector.load %arg15[%71, %c0_34] : memref<64x128xf32, #tpu.memory_space<vmem>>, vector<8x128xf32>
    %73 = arith.truncf %44 : vector<8x32xf32> to vector<8x32xbf16>
    %cst_35 = arith.constant dense<0.000000e+00> : vector<8x128xf32>
    %74 = tpu.matmul %73, %10, %cst_35 {dimension_numbers = #tpu.dot_dimension_numbers<[1], [0], [0], [1], [0, 0, 1, 1], [], []>} : vector<8x32xbf16>, vector<32x128xbf16>, vector<8x128xf32> -> vector<8x128xf32>
    %75 = arith.addf %72, %74 : vector<8x128xf32>
    %76 = vector.extract_strided_slice %75 {offsets = [0, 0], sizes = [8, 96], strides = [1, 1]} : vector<8x128xf32> to vector<8x96xf32>
    %77 = arith.negf %76 : vector<8x96xf32>
    %78 = math.exp %77 : vector<8x96xf32>
    %cst_36 = arith.constant 1.000000e+00 : f32
    %79 = vector.broadcast %cst_36 : f32 to vector<8x96xf32>
    %80 = arith.addf %79, %78 : vector<8x96xf32>
    %81 = arith.divf %79, %80 : vector<8x96xf32>
    %82 = vector.extract_strided_slice %75 {offsets = [0, 96], sizes = [8, 32], strides = [1, 1]} : vector<8x128xf32> to vector<8x32xf32>
    %83 = math.tanh %82 : vector<8x32xf32>
    %84 = vector.extract_strided_slice %81 {offsets = [0, 0], sizes = [8, 32], strides = [1, 1]} : vector<8x96xf32> to vector<8x32xf32>
    %85 = vector.extract_strided_slice %81 {offsets = [0, 32], sizes = [8, 32], strides = [1, 1]} : vector<8x96xf32> to vector<8x32xf32>
    %86 = vector.extract_strided_slice %81 {offsets = [0, 64], sizes = [8, 32], strides = [1, 1]} : vector<8x96xf32> to vector<8x32xf32>
    %87 = arith.mulf %84, %42 : vector<8x32xf32>
    %88 = arith.mulf %85, %83 : vector<8x32xf32>
    %89 = arith.addf %87, %88 : vector<8x32xf32>
    %90 = math.tanh %89 : vector<8x32xf32>
    %91 = arith.mulf %86, %90 : vector<8x32xf32>
    %92 = arith.truncf %91 : vector<8x32xf32> to vector<8x32xbf16>
    %cst_37 = arith.constant dense<0.000000e+00> : vector<8x128xf32>
    %93 = tpu.matmul %92, %11, %cst_37 {dimension_numbers = #tpu.dot_dimension_numbers<[1], [0], [0], [1], [0, 0, 1, 1], [], []>} : vector<8x32xbf16>, vector<32x128xbf16>, vector<8x128xf32> -> vector<8x128xf32>
    %94 = arith.addf %70, %93 : vector<8x128xf32>
    %95 = arith.addf %94, %15 : vector<8x128xf32>
    %96 = vector.extract_strided_slice %95 {offsets = [0, 0], sizes = [8, 96], strides = [1, 1]} : vector<8x128xf32> to vector<8x96xf32>
    %97 = arith.negf %96 : vector<8x96xf32>
    %98 = math.exp %97 : vector<8x96xf32>
    %cst_38 = arith.constant 1.000000e+00 : f32
    %99 = vector.broadcast %cst_38 : f32 to vector<8x96xf32>
    %100 = arith.addf %99, %98 : vector<8x96xf32>
    %101 = arith.divf %99, %100 : vector<8x96xf32>
    %102 = vector.extract_strided_slice %95 {offsets = [0, 96], sizes = [8, 32], strides = [1, 1]} : vector<8x128xf32> to vector<8x32xf32>
    %103 = math.tanh %102 : vector<8x32xf32>
    %104 = vector.extract_strided_slice %101 {offsets = [0, 0], sizes = [8, 32], strides = [1, 1]} : vector<8x96xf32> to vector<8x32xf32>
    %105 = vector.extract_strided_slice %101 {offsets = [0, 32], sizes = [8, 32], strides = [1, 1]} : vector<8x96xf32> to vector<8x32xf32>
    %106 = vector.extract_strided_slice %101 {offsets = [0, 64], sizes = [8, 32], strides = [1, 1]} : vector<8x96xf32> to vector<8x32xf32>
    %107 = arith.mulf %104, %62 : vector<8x32xf32>
    %108 = arith.mulf %105, %103 : vector<8x32xf32>
    %109 = arith.addf %107, %108 : vector<8x32xf32>
    %110 = math.tanh %109 : vector<8x32xf32>
    %111 = arith.mulf %106, %110 : vector<8x32xf32>
    %112 = arith.index_cast %68 : i32 to index
    %c0_39 = arith.constant 0 : index
    %113 = vector.load %arg16[%112, %c0_39] : memref<64x32xf32, #tpu.memory_space<vmem>>, vector<8x32xf32>
    tpu.vector_store %arg16[%112, %c0_39], %111 {strides = array<i32>} : memref<64x32xf32, #tpu.memory_space<vmem>>, vector<8x32xf32>,
    %c2_i32 = arith.constant 2 : i32
    %c8_i32_40 = arith.constant 8 : i32
    %114 = arith.muli %c2_i32, %c8_i32_40 : i32
    %115 = tpu.assume_multiple %114, 8 : i32
    %116 = arith.truncf %111 : vector<8x32xf32> to vector<8x32xbf16>
    %cst_41 = arith.constant dense<0.000000e+00> : vector<8x128xf32>
    %117 = tpu.matmul %116, %12, %cst_41 {dimension_numbers = #tpu.dot_dimension_numbers<[1], [0], [0], [1], [0, 0, 1, 1], [], []>} : vector<8x32xbf16>, vector<32x128xbf16>, vector<8x128xf32> -> vector<8x128xf32>
    %118 = arith.index_cast %115 : i32 to index
    %c0_42 = arith.constant 0 : index
    %119 = vector.load %arg15[%118, %c0_42] : memref<64x128xf32, #tpu.memory_space<vmem>>, vector<8x128xf32>
    %120 = arith.truncf %91 : vector<8x32xf32> to vector<8x32xbf16>
    %cst_43 = arith.constant dense<0.000000e+00> : vector<8x128xf32>
    %121 = tpu.matmul %120, %10, %cst_43 {dimension_numbers = #tpu.dot_dimension_numbers<[1], [0], [0], [1], [0, 0, 1, 1], [], []>} : vector<8x32xbf16>, vector<32x128xbf16>, vector<8x128xf32> -> vector<8x128xf32>
    %122 = arith.addf %119, %121 : vector<8x128xf32>
    %123 = vector.extract_strided_slice %122 {offsets = [0, 0], sizes = [8, 96], strides = [1, 1]} : vector<8x128xf32> to vector<8x96xf32>
    %124 = arith.negf %123 : vector<8x96xf32>
    %125 = math.exp %124 : vector<8x96xf32>
    %cst_44 = arith.constant 1.000000e+00 : f32
    %126 = vector.broadcast %cst_44 : f32 to vector<8x96xf32>
    %127 = arith.addf %126, %125 : vector<8x96xf32>
    %128 = arith.divf %126, %127 : vector<8x96xf32>
    %129 = vector.extract_strided_slice %122 {offsets = [0, 96], sizes = [8, 32], strides = [1, 1]} : vector<8x128xf32> to vector<8x32xf32>
    %130 = math.tanh %129 : vector<8x32xf32>
    %131 = vector.extract_strided_slice %128 {offsets = [0, 0], sizes = [8, 32], strides = [1, 1]} : vector<8x96xf32> to vector<8x32xf32>
    %132 = vector.extract_strided_slice %128 {offsets = [0, 32], sizes = [8, 32], strides = [1, 1]} : vector<8x96xf32> to vector<8x32xf32>
    %133 = vector.extract_strided_slice %128 {offsets = [0, 64], sizes = [8, 32], strides = [1, 1]} : vector<8x96xf32> to vector<8x32xf32>
    %134 = arith.mulf %131, %89 : vector<8x32xf32>
    %135 = arith.mulf %132, %130 : vector<8x32xf32>
    %136 = arith.addf %134, %135 : vector<8x32xf32>
    %137 = math.tanh %136 : vector<8x32xf32>
    %138 = arith.mulf %133, %137 : vector<8x32xf32>
    %139 = arith.truncf %138 : vector<8x32xf32> to vector<8x32xbf16>
    %cst_45 = arith.constant dense<0.000000e+00> : vector<8x128xf32>
    %140 = tpu.matmul %139, %11, %cst_45 {dimension_numbers = #tpu.dot_dimension_numbers<[1], [0], [0], [1], [0, 0, 1, 1], [], []>} : vector<8x32xbf16>, vector<32x128xbf16>, vector<8x128xf32> -> vector<8x128xf32>
    %141 = arith.addf %117, %140 : vector<8x128xf32>
    %142 = arith.addf %141, %15 : vector<8x128xf32>
    %143 = vector.extract_strided_slice %142 {offsets = [0, 0], sizes = [8, 96], strides = [1, 1]} : vector<8x128xf32> to vector<8x96xf32>
    %144 = arith.negf %143 : vector<8x96xf32>
    %145 = math.exp %144 : vector<8x96xf32>
    %cst_46 = arith.constant 1.000000e+00 : f32
    %146 = vector.broadcast %cst_46 : f32 to vector<8x96xf32>
    %147 = arith.addf %146, %145 : vector<8x96xf32>
    %148 = arith.divf %146, %147 : vector<8x96xf32>
    %149 = vector.extract_strided_slice %142 {offsets = [0, 96], sizes = [8, 32], strides = [1, 1]} : vector<8x128xf32> to vector<8x32xf32>
    %150 = math.tanh %149 : vector<8x32xf32>
    %151 = vector.extract_strided_slice %148 {offsets = [0, 0], sizes = [8, 32], strides = [1, 1]} : vector<8x96xf32> to vector<8x32xf32>
    %152 = vector.extract_strided_slice %148 {offsets = [0, 32], sizes = [8, 32], strides = [1, 1]} : vector<8x96xf32> to vector<8x32xf32>
    %153 = vector.extract_strided_slice %148 {offsets = [0, 64], sizes = [8, 32], strides = [1, 1]} : vector<8x96xf32> to vector<8x32xf32>
    %154 = arith.mulf %151, %109 : vector<8x32xf32>
    %155 = arith.mulf %152, %150 : vector<8x32xf32>
    %156 = arith.addf %154, %155 : vector<8x32xf32>
    %157 = math.tanh %156 : vector<8x32xf32>
    %158 = arith.mulf %153, %157 : vector<8x32xf32>
    %159 = arith.index_cast %115 : i32 to index
    %c0_47 = arith.constant 0 : index
    %160 = vector.load %arg16[%159, %c0_47] : memref<64x32xf32, #tpu.memory_space<vmem>>, vector<8x32xf32>
    tpu.vector_store %arg16[%159, %c0_47], %158 {strides = array<i32>} : memref<64x32xf32, #tpu.memory_space<vmem>>, vector<8x32xf32>,
    %c3_i32 = arith.constant 3 : i32
    %c8_i32_48 = arith.constant 8 : i32
    %161 = arith.muli %c3_i32, %c8_i32_48 : i32
    %162 = tpu.assume_multiple %161, 8 : i32
    %163 = arith.truncf %158 : vector<8x32xf32> to vector<8x32xbf16>
    %cst_49 = arith.constant dense<0.000000e+00> : vector<8x128xf32>
    %164 = tpu.matmul %163, %12, %cst_49 {dimension_numbers = #tpu.dot_dimension_numbers<[1], [0], [0], [1], [0, 0, 1, 1], [], []>} : vector<8x32xbf16>, vector<32x128xbf16>, vector<8x128xf32> -> vector<8x128xf32>
    %165 = arith.index_cast %162 : i32 to index
    %c0_50 = arith.constant 0 : index
    %166 = vector.load %arg15[%165, %c0_50] : memref<64x128xf32, #tpu.memory_space<vmem>>, vector<8x128xf32>
    %167 = arith.truncf %138 : vector<8x32xf32> to vector<8x32xbf16>
    %cst_51 = arith.constant dense<0.000000e+00> : vector<8x128xf32>
    %168 = tpu.matmul %167, %10, %cst_51 {dimension_numbers = #tpu.dot_dimension_numbers<[1], [0], [0], [1], [0, 0, 1, 1], [], []>} : vector<8x32xbf16>, vector<32x128xbf16>, vector<8x128xf32> -> vector<8x128xf32>
    %169 = arith.addf %166, %168 : vector<8x128xf32>
    %170 = vector.extract_strided_slice %169 {offsets = [0, 0], sizes = [8, 96], strides = [1, 1]} : vector<8x128xf32> to vector<8x96xf32>
    %171 = arith.negf %170 : vector<8x96xf32>
    %172 = math.exp %171 : vector<8x96xf32>
    %cst_52 = arith.constant 1.000000e+00 : f32
    %173 = vector.broadcast %cst_52 : f32 to vector<8x96xf32>
    %174 = arith.addf %173, %172 : vector<8x96xf32>
    %175 = arith.divf %173, %174 : vector<8x96xf32>
    %176 = vector.extract_strided_slice %169 {offsets = [0, 96], sizes = [8, 32], strides = [1, 1]} : vector<8x128xf32> to vector<8x32xf32>
    %177 = math.tanh %176 : vector<8x32xf32>
    %178 = vector.extract_strided_slice %175 {offsets = [0, 0], sizes = [8, 32], strides = [1, 1]} : vector<8x96xf32> to vector<8x32xf32>
    %179 = vector.extract_strided_slice %175 {offsets = [0, 32], sizes = [8, 32], strides = [1, 1]} : vector<8x96xf32> to vector<8x32xf32>
    %180 = vector.extract_strided_slice %175 {offsets = [0, 64], sizes = [8, 32], strides = [1, 1]} : vector<8x96xf32> to vector<8x32xf32>
    %181 = arith.mulf %178, %136 : vector<8x32xf32>
    %182 = arith.mulf %179, %177 : vector<8x32xf32>
    %183 = arith.addf %181, %182 : vector<8x32xf32>
    %184 = math.tanh %183 : vector<8x32xf32>
    %185 = arith.mulf %180, %184 : vector<8x32xf32>
    %186 = arith.truncf %185 : vector<8x32xf32> to vector<8x32xbf16>
    %cst_53 = arith.constant dense<0.000000e+00> : vector<8x128xf32>
    %187 = tpu.matmul %186, %11, %cst_53 {dimension_numbers = #tpu.dot_dimension_numbers<[1], [0], [0], [1], [0, 0, 1, 1], [], []>} : vector<8x32xbf16>, vector<32x128xbf16>, vector<8x128xf32> -> vector<8x128xf32>
    %188 = arith.addf %164, %187 : vector<8x128xf32>
    %189 = arith.addf %188, %15 : vector<8x128xf32>
    %190 = vector.extract_strided_slice %189 {offsets = [0, 0], sizes = [8, 96], strides = [1, 1]} : vector<8x128xf32> to vector<8x96xf32>
    %191 = arith.negf %190 : vector<8x96xf32>
    %192 = math.exp %191 : vector<8x96xf32>
    %cst_54 = arith.constant 1.000000e+00 : f32
    %193 = vector.broadcast %cst_54 : f32 to vector<8x96xf32>
    %194 = arith.addf %193, %192 : vector<8x96xf32>
    %195 = arith.divf %193, %194 : vector<8x96xf32>
    %196 = vector.extract_strided_slice %189 {offsets = [0, 96], sizes = [8, 32], strides = [1, 1]} : vector<8x128xf32> to vector<8x32xf32>
    %197 = math.tanh %196 : vector<8x32xf32>
    %198 = vector.extract_strided_slice %195 {offsets = [0, 0], sizes = [8, 32], strides = [1, 1]} : vector<8x96xf32> to vector<8x32xf32>
    %199 = vector.extract_strided_slice %195 {offsets = [0, 32], sizes = [8, 32], strides = [1, 1]} : vector<8x96xf32> to vector<8x32xf32>
    %200 = vector.extract_strided_slice %195 {offsets = [0, 64], sizes = [8, 32], strides = [1, 1]} : vector<8x96xf32> to vector<8x32xf32>
    %201 = arith.mulf %198, %156 : vector<8x32xf32>
    %202 = arith.mulf %199, %197 : vector<8x32xf32>
    %203 = arith.addf %201, %202 : vector<8x32xf32>
    %204 = math.tanh %203 : vector<8x32xf32>
    %205 = arith.mulf %200, %204 : vector<8x32xf32>
    %206 = arith.index_cast %162 : i32 to index
    %c0_55 = arith.constant 0 : index
    %207 = vector.load %arg16[%206, %c0_55] : memref<64x32xf32, #tpu.memory_space<vmem>>, vector<8x32xf32>
    tpu.vector_store %arg16[%206, %c0_55], %205 {strides = array<i32>} : memref<64x32xf32, #tpu.memory_space<vmem>>, vector<8x32xf32>,
    %c4_i32 = arith.constant 4 : i32
    %c8_i32_56 = arith.constant 8 : i32
    %208 = arith.muli %c4_i32, %c8_i32_56 : i32
    %209 = tpu.assume_multiple %208, 8 : i32
    %210 = arith.truncf %205 : vector<8x32xf32> to vector<8x32xbf16>
    %cst_57 = arith.constant dense<0.000000e+00> : vector<8x128xf32>
    %211 = tpu.matmul %210, %12, %cst_57 {dimension_numbers = #tpu.dot_dimension_numbers<[1], [0], [0], [1], [0, 0, 1, 1], [], []>} : vector<8x32xbf16>, vector<32x128xbf16>, vector<8x128xf32> -> vector<8x128xf32>
    %212 = arith.index_cast %209 : i32 to index
    %c0_58 = arith.constant 0 : index
    %213 = vector.load %arg15[%212, %c0_58] : memref<64x128xf32, #tpu.memory_space<vmem>>, vector<8x128xf32>
    %214 = arith.truncf %185 : vector<8x32xf32> to vector<8x32xbf16>
    %cst_59 = arith.constant dense<0.000000e+00> : vector<8x128xf32>
    %215 = tpu.matmul %214, %10, %cst_59 {dimension_numbers = #tpu.dot_dimension_numbers<[1], [0], [0], [1], [0, 0, 1, 1], [], []>} : vector<8x32xbf16>, vector<32x128xbf16>, vector<8x128xf32> -> vector<8x128xf32>
    %216 = arith.addf %213, %215 : vector<8x128xf32>
    %217 = vector.extract_strided_slice %216 {offsets = [0, 0], sizes = [8, 96], strides = [1, 1]} : vector<8x128xf32> to vector<8x96xf32>
    %218 = arith.negf %217 : vector<8x96xf32>
    %219 = math.exp %218 : vector<8x96xf32>
    %cst_60 = arith.constant 1.000000e+00 : f32
    %220 = vector.broadcast %cst_60 : f32 to vector<8x96xf32>
    %221 = arith.addf %220, %219 : vector<8x96xf32>
    %222 = arith.divf %220, %221 : vector<8x96xf32>
    %223 = vector.extract_strided_slice %216 {offsets = [0, 96], sizes = [8, 32], strides = [1, 1]} : vector<8x128xf32> to vector<8x32xf32>
    %224 = math.tanh %223 : vector<8x32xf32>
    %225 = vector.extract_strided_slice %222 {offsets = [0, 0], sizes = [8, 32], strides = [1, 1]} : vector<8x96xf32> to vector<8x32xf32>
    %226 = vector.extract_strided_slice %222 {offsets = [0, 32], sizes = [8, 32], strides = [1, 1]} : vector<8x96xf32> to vector<8x32xf32>
    %227 = vector.extract_strided_slice %222 {offsets = [0, 64], sizes = [8, 32], strides = [1, 1]} : vector<8x96xf32> to vector<8x32xf32>
    %228 = arith.mulf %225, %183 : vector<8x32xf32>
    %229 = arith.mulf %226, %224 : vector<8x32xf32>
    %230 = arith.addf %228, %229 : vector<8x32xf32>
    %231 = math.tanh %230 : vector<8x32xf32>
    %232 = arith.mulf %227, %231 : vector<8x32xf32>
    %233 = arith.truncf %232 : vector<8x32xf32> to vector<8x32xbf16>
    %cst_61 = arith.constant dense<0.000000e+00> : vector<8x128xf32>
    %234 = tpu.matmul %233, %11, %cst_61 {dimension_numbers = #tpu.dot_dimension_numbers<[1], [0], [0], [1], [0, 0, 1, 1], [], []>} : vector<8x32xbf16>, vector<32x128xbf16>, vector<8x128xf32> -> vector<8x128xf32>
    %235 = arith.addf %211, %234 : vector<8x128xf32>
    %236 = arith.addf %235, %15 : vector<8x128xf32>
    %237 = vector.extract_strided_slice %236 {offsets = [0, 0], sizes = [8, 96], strides = [1, 1]} : vector<8x128xf32> to vector<8x96xf32>
    %238 = arith.negf %237 : vector<8x96xf32>
    %239 = math.exp %238 : vector<8x96xf32>
    %cst_62 = arith.constant 1.000000e+00 : f32
    %240 = vector.broadcast %cst_62 : f32 to vector<8x96xf32>
    %241 = arith.addf %240, %239 : vector<8x96xf32>
    %242 = arith.divf %240, %241 : vector<8x96xf32>
    %243 = vector.extract_strided_slice %236 {offsets = [0, 96], sizes = [8, 32], strides = [1, 1]} : vector<8x128xf32> to vector<8x32xf32>
    %244 = math.tanh %243 : vector<8x32xf32>
    %245 = vector.extract_strided_slice %242 {offsets = [0, 0], sizes = [8, 32], strides = [1, 1]} : vector<8x96xf32> to vector<8x32xf32>
    %246 = vector.extract_strided_slice %242 {offsets = [0, 32], sizes = [8, 32], strides = [1, 1]} : vector<8x96xf32> to vector<8x32xf32>
    %247 = vector.extract_strided_slice %242 {offsets = [0, 64], sizes = [8, 32], strides = [1, 1]} : vector<8x96xf32> to vector<8x32xf32>
    %248 = arith.mulf %245, %203 : vector<8x32xf32>
    %249 = arith.mulf %246, %244 : vector<8x32xf32>
    %250 = arith.addf %248, %249 : vector<8x32xf32>
    %251 = math.tanh %250 : vector<8x32xf32>
    %252 = arith.mulf %247, %251 : vector<8x32xf32>
    %253 = arith.index_cast %209 : i32 to index
    %c0_63 = arith.constant 0 : index
    %254 = vector.load %arg16[%253, %c0_63] : memref<64x32xf32, #tpu.memory_space<vmem>>, vector<8x32xf32>
    tpu.vector_store %arg16[%253, %c0_63], %252 {strides = array<i32>} : memref<64x32xf32, #tpu.memory_space<vmem>>, vector<8x32xf32>,
    %c5_i32 = arith.constant 5 : i32
    %c8_i32_64 = arith.constant 8 : i32
    %255 = arith.muli %c5_i32, %c8_i32_64 : i32
    %256 = tpu.assume_multiple %255, 8 : i32
    %257 = arith.truncf %252 : vector<8x32xf32> to vector<8x32xbf16>
    %cst_65 = arith.constant dense<0.000000e+00> : vector<8x128xf32>
    %258 = tpu.matmul %257, %12, %cst_65 {dimension_numbers = #tpu.dot_dimension_numbers<[1], [0], [0], [1], [0, 0, 1, 1], [], []>} : vector<8x32xbf16>, vector<32x128xbf16>, vector<8x128xf32> -> vector<8x128xf32>
    %259 = arith.index_cast %256 : i32 to index
    %c0_66 = arith.constant 0 : index
    %260 = vector.load %arg15[%259, %c0_66] : memref<64x128xf32, #tpu.memory_space<vmem>>, vector<8x128xf32>
    %261 = arith.truncf %232 : vector<8x32xf32> to vector<8x32xbf16>
    %cst_67 = arith.constant dense<0.000000e+00> : vector<8x128xf32>
    %262 = tpu.matmul %261, %10, %cst_67 {dimension_numbers = #tpu.dot_dimension_numbers<[1], [0], [0], [1], [0, 0, 1, 1], [], []>} : vector<8x32xbf16>, vector<32x128xbf16>, vector<8x128xf32> -> vector<8x128xf32>
    %263 = arith.addf %260, %262 : vector<8x128xf32>
    %264 = vector.extract_strided_slice %263 {offsets = [0, 0], sizes = [8, 96], strides = [1, 1]} : vector<8x128xf32> to vector<8x96xf32>
    %265 = arith.negf %264 : vector<8x96xf32>
    %266 = math.exp %265 : vector<8x96xf32>
    %cst_68 = arith.constant 1.000000e+00 : f32
    %267 = vector.broadcast %cst_68 : f32 to vector<8x96xf32>
    %268 = arith.addf %267, %266 : vector<8x96xf32>
    %269 = arith.divf %267, %268 : vector<8x96xf32>
    %270 = vector.extract_strided_slice %263 {offsets = [0, 96], sizes = [8, 32], strides = [1, 1]} : vector<8x128xf32> to vector<8x32xf32>
    %271 = math.tanh %270 : vector<8x32xf32>
    %272 = vector.extract_strided_slice %269 {offsets = [0, 0], sizes = [8, 32], strides = [1, 1]} : vector<8x96xf32> to vector<8x32xf32>
    %273 = vector.extract_strided_slice %269 {offsets = [0, 32], sizes = [8, 32], strides = [1, 1]} : vector<8x96xf32> to vector<8x32xf32>
    %274 = vector.extract_strided_slice %269 {offsets = [0, 64], sizes = [8, 32], strides = [1, 1]} : vector<8x96xf32> to vector<8x32xf32>
    %275 = arith.mulf %272, %230 : vector<8x32xf32>
    %276 = arith.mulf %273, %271 : vector<8x32xf32>
    %277 = arith.addf %275, %276 : vector<8x32xf32>
    %278 = math.tanh %277 : vector<8x32xf32>
    %279 = arith.mulf %274, %278 : vector<8x32xf32>
    %280 = arith.truncf %279 : vector<8x32xf32> to vector<8x32xbf16>
    %cst_69 = arith.constant dense<0.000000e+00> : vector<8x128xf32>
    %281 = tpu.matmul %280, %11, %cst_69 {dimension_numbers = #tpu.dot_dimension_numbers<[1], [0], [0], [1], [0, 0, 1, 1], [], []>} : vector<8x32xbf16>, vector<32x128xbf16>, vector<8x128xf32> -> vector<8x128xf32>
    %282 = arith.addf %258, %281 : vector<8x128xf32>
    %283 = arith.addf %282, %15 : vector<8x128xf32>
    %284 = vector.extract_strided_slice %283 {offsets = [0, 0], sizes = [8, 96], strides = [1, 1]} : vector<8x128xf32> to vector<8x96xf32>
    %285 = arith.negf %284 : vector<8x96xf32>
    %286 = math.exp %285 : vector<8x96xf32>
    %cst_70 = arith.constant 1.000000e+00 : f32
    %287 = vector.broadcast %cst_70 : f32 to vector<8x96xf32>
    %288 = arith.addf %287, %286 : vector<8x96xf32>
    %289 = arith.divf %287, %288 : vector<8x96xf32>
    %290 = vector.extract_strided_slice %283 {offsets = [0, 96], sizes = [8, 32], strides = [1, 1]} : vector<8x128xf32> to vector<8x32xf32>
    %291 = math.tanh %290 : vector<8x32xf32>
    %292 = vector.extract_strided_slice %289 {offsets = [0, 0], sizes = [8, 32], strides = [1, 1]} : vector<8x96xf32> to vector<8x32xf32>
    %293 = vector.extract_strided_slice %289 {offsets = [0, 32], sizes = [8, 32], strides = [1, 1]} : vector<8x96xf32> to vector<8x32xf32>
    %294 = vector.extract_strided_slice %289 {offsets = [0, 64], sizes = [8, 32], strides = [1, 1]} : vector<8x96xf32> to vector<8x32xf32>
    %295 = arith.mulf %292, %250 : vector<8x32xf32>
    %296 = arith.mulf %293, %291 : vector<8x32xf32>
    %297 = arith.addf %295, %296 : vector<8x32xf32>
    %298 = math.tanh %297 : vector<8x32xf32>
    %299 = arith.mulf %294, %298 : vector<8x32xf32>
    %300 = arith.index_cast %256 : i32 to index
    %c0_71 = arith.constant 0 : index
    %301 = vector.load %arg16[%300, %c0_71] : memref<64x32xf32, #tpu.memory_space<vmem>>, vector<8x32xf32>
    tpu.vector_store %arg16[%300, %c0_71], %299 {strides = array<i32>} : memref<64x32xf32, #tpu.memory_space<vmem>>, vector<8x32xf32>,
    %c6_i32 = arith.constant 6 : i32
    %c8_i32_72 = arith.constant 8 : i32
    %302 = arith.muli %c6_i32, %c8_i32_72 : i32
    %303 = tpu.assume_multiple %302, 8 : i32
    %304 = arith.truncf %299 : vector<8x32xf32> to vector<8x32xbf16>
    %cst_73 = arith.constant dense<0.000000e+00> : vector<8x128xf32>
    %305 = tpu.matmul %304, %12, %cst_73 {dimension_numbers = #tpu.dot_dimension_numbers<[1], [0], [0], [1], [0, 0, 1, 1], [], []>} : vector<8x32xbf16>, vector<32x128xbf16>, vector<8x128xf32> -> vector<8x128xf32>
    %306 = arith.index_cast %303 : i32 to index
    %c0_74 = arith.constant 0 : index
    %307 = vector.load %arg15[%306, %c0_74] : memref<64x128xf32, #tpu.memory_space<vmem>>, vector<8x128xf32>
    %308 = arith.truncf %279 : vector<8x32xf32> to vector<8x32xbf16>
    %cst_75 = arith.constant dense<0.000000e+00> : vector<8x128xf32>
    %309 = tpu.matmul %308, %10, %cst_75 {dimension_numbers = #tpu.dot_dimension_numbers<[1], [0], [0], [1], [0, 0, 1, 1], [], []>} : vector<8x32xbf16>, vector<32x128xbf16>, vector<8x128xf32> -> vector<8x128xf32>
    %310 = arith.addf %307, %309 : vector<8x128xf32>
    %311 = vector.extract_strided_slice %310 {offsets = [0, 0], sizes = [8, 96], strides = [1, 1]} : vector<8x128xf32> to vector<8x96xf32>
    %312 = arith.negf %311 : vector<8x96xf32>
    %313 = math.exp %312 : vector<8x96xf32>
    %cst_76 = arith.constant 1.000000e+00 : f32
    %314 = vector.broadcast %cst_76 : f32 to vector<8x96xf32>
    %315 = arith.addf %314, %313 : vector<8x96xf32>
    %316 = arith.divf %314, %315 : vector<8x96xf32>
    %317 = vector.extract_strided_slice %310 {offsets = [0, 96], sizes = [8, 32], strides = [1, 1]} : vector<8x128xf32> to vector<8x32xf32>
    %318 = math.tanh %317 : vector<8x32xf32>
    %319 = vector.extract_strided_slice %316 {offsets = [0, 0], sizes = [8, 32], strides = [1, 1]} : vector<8x96xf32> to vector<8x32xf32>
    %320 = vector.extract_strided_slice %316 {offsets = [0, 32], sizes = [8, 32], strides = [1, 1]} : vector<8x96xf32> to vector<8x32xf32>
    %321 = vector.extract_strided_slice %316 {offsets = [0, 64], sizes = [8, 32], strides = [1, 1]} : vector<8x96xf32> to vector<8x32xf32>
    %322 = arith.mulf %319, %277 : vector<8x32xf32>
    %323 = arith.mulf %320, %318 : vector<8x32xf32>
    %324 = arith.addf %322, %323 : vector<8x32xf32>
    %325 = math.tanh %324 : vector<8x32xf32>
    %326 = arith.mulf %321, %325 : vector<8x32xf32>
    %327 = arith.truncf %326 : vector<8x32xf32> to vector<8x32xbf16>
    %cst_77 = arith.constant dense<0.000000e+00> : vector<8x128xf32>
    %328 = tpu.matmul %327, %11, %cst_77 {dimension_numbers = #tpu.dot_dimension_numbers<[1], [0], [0], [1], [0, 0, 1, 1], [], []>} : vector<8x32xbf16>, vector<32x128xbf16>, vector<8x128xf32> -> vector<8x128xf32>
    %329 = arith.addf %305, %328 : vector<8x128xf32>
    %330 = arith.addf %329, %15 : vector<8x128xf32>
    %331 = vector.extract_strided_slice %330 {offsets = [0, 0], sizes = [8, 96], strides = [1, 1]} : vector<8x128xf32> to vector<8x96xf32>
    %332 = arith.negf %331 : vector<8x96xf32>
    %333 = math.exp %332 : vector<8x96xf32>
    %cst_78 = arith.constant 1.000000e+00 : f32
    %334 = vector.broadcast %cst_78 : f32 to vector<8x96xf32>
    %335 = arith.addf %334, %333 : vector<8x96xf32>
    %336 = arith.divf %334, %335 : vector<8x96xf32>
    %337 = vector.extract_strided_slice %330 {offsets = [0, 96], sizes = [8, 32], strides = [1, 1]} : vector<8x128xf32> to vector<8x32xf32>
    %338 = math.tanh %337 : vector<8x32xf32>
    %339 = vector.extract_strided_slice %336 {offsets = [0, 0], sizes = [8, 32], strides = [1, 1]} : vector<8x96xf32> to vector<8x32xf32>
    %340 = vector.extract_strided_slice %336 {offsets = [0, 32], sizes = [8, 32], strides = [1, 1]} : vector<8x96xf32> to vector<8x32xf32>
    %341 = vector.extract_strided_slice %336 {offsets = [0, 64], sizes = [8, 32], strides = [1, 1]} : vector<8x96xf32> to vector<8x32xf32>
    %342 = arith.mulf %339, %297 : vector<8x32xf32>
    %343 = arith.mulf %340, %338 : vector<8x32xf32>
    %344 = arith.addf %342, %343 : vector<8x32xf32>
    %345 = math.tanh %344 : vector<8x32xf32>
    %346 = arith.mulf %341, %345 : vector<8x32xf32>
    %347 = arith.index_cast %303 : i32 to index
    %c0_79 = arith.constant 0 : index
    %348 = vector.load %arg16[%347, %c0_79] : memref<64x32xf32, #tpu.memory_space<vmem>>, vector<8x32xf32>
    tpu.vector_store %arg16[%347, %c0_79], %346 {strides = array<i32>} : memref<64x32xf32, #tpu.memory_space<vmem>>, vector<8x32xf32>,
    %c7_i32 = arith.constant 7 : i32
    %c8_i32_80 = arith.constant 8 : i32
    %349 = arith.muli %c7_i32, %c8_i32_80 : i32
    %350 = tpu.assume_multiple %349, 8 : i32
    %351 = arith.truncf %346 : vector<8x32xf32> to vector<8x32xbf16>
    %cst_81 = arith.constant dense<0.000000e+00> : vector<8x128xf32>
    %352 = tpu.matmul %351, %12, %cst_81 {dimension_numbers = #tpu.dot_dimension_numbers<[1], [0], [0], [1], [0, 0, 1, 1], [], []>} : vector<8x32xbf16>, vector<32x128xbf16>, vector<8x128xf32> -> vector<8x128xf32>
    %353 = arith.index_cast %350 : i32 to index
    %c0_82 = arith.constant 0 : index
    %354 = vector.load %arg15[%353, %c0_82] : memref<64x128xf32, #tpu.memory_space<vmem>>, vector<8x128xf32>
    %355 = arith.truncf %326 : vector<8x32xf32> to vector<8x32xbf16>
    %cst_83 = arith.constant dense<0.000000e+00> : vector<8x128xf32>
    %356 = tpu.matmul %355, %10, %cst_83 {dimension_numbers = #tpu.dot_dimension_numbers<[1], [0], [0], [1], [0, 0, 1, 1], [], []>} : vector<8x32xbf16>, vector<32x128xbf16>, vector<8x128xf32> -> vector<8x128xf32>
    %357 = arith.addf %354, %356 : vector<8x128xf32>
    %358 = vector.extract_strided_slice %357 {offsets = [0, 0], sizes = [8, 96], strides = [1, 1]} : vector<8x128xf32> to vector<8x96xf32>
    %359 = arith.negf %358 : vector<8x96xf32>
    %360 = math.exp %359 : vector<8x96xf32>
    %cst_84 = arith.constant 1.000000e+00 : f32
    %361 = vector.broadcast %cst_84 : f32 to vector<8x96xf32>
    %362 = arith.addf %361, %360 : vector<8x96xf32>
    %363 = arith.divf %361, %362 : vector<8x96xf32>
    %364 = vector.extract_strided_slice %357 {offsets = [0, 96], sizes = [8, 32], strides = [1, 1]} : vector<8x128xf32> to vector<8x32xf32>
    %365 = math.tanh %364 : vector<8x32xf32>
    %366 = vector.extract_strided_slice %363 {offsets = [0, 0], sizes = [8, 32], strides = [1, 1]} : vector<8x96xf32> to vector<8x32xf32>
    %367 = vector.extract_strided_slice %363 {offsets = [0, 32], sizes = [8, 32], strides = [1, 1]} : vector<8x96xf32> to vector<8x32xf32>
    %368 = vector.extract_strided_slice %363 {offsets = [0, 64], sizes = [8, 32], strides = [1, 1]} : vector<8x96xf32> to vector<8x32xf32>
    %369 = arith.mulf %366, %324 : vector<8x32xf32>
    %370 = arith.mulf %367, %365 : vector<8x32xf32>
    %371 = arith.addf %369, %370 : vector<8x32xf32>
    %372 = math.tanh %371 : vector<8x32xf32>
    %373 = arith.mulf %368, %372 : vector<8x32xf32>
    %374 = arith.truncf %373 : vector<8x32xf32> to vector<8x32xbf16>
    %cst_85 = arith.constant dense<0.000000e+00> : vector<8x128xf32>
    %375 = tpu.matmul %374, %11, %cst_85 {dimension_numbers = #tpu.dot_dimension_numbers<[1], [0], [0], [1], [0, 0, 1, 1], [], []>} : vector<8x32xbf16>, vector<32x128xbf16>, vector<8x128xf32> -> vector<8x128xf32>
    %376 = arith.addf %352, %375 : vector<8x128xf32>
    %377 = arith.addf %376, %15 : vector<8x128xf32>
    %378 = vector.extract_strided_slice %377 {offsets = [0, 0], sizes = [8, 96], strides = [1, 1]} : vector<8x128xf32> to vector<8x96xf32>
    %379 = arith.negf %378 : vector<8x96xf32>
    %380 = math.exp %379 : vector<8x96xf32>
    %cst_86 = arith.constant 1.000000e+00 : f32
    %381 = vector.broadcast %cst_86 : f32 to vector<8x96xf32>
    %382 = arith.addf %381, %380 : vector<8x96xf32>
    %383 = arith.divf %381, %382 : vector<8x96xf32>
    %384 = vector.extract_strided_slice %377 {offsets = [0, 96], sizes = [8, 32], strides = [1, 1]} : vector<8x128xf32> to vector<8x32xf32>
    %385 = math.tanh %384 : vector<8x32xf32>
    %386 = vector.extract_strided_slice %383 {offsets = [0, 0], sizes = [8, 32], strides = [1, 1]} : vector<8x96xf32> to vector<8x32xf32>
    %387 = vector.extract_strided_slice %383 {offsets = [0, 32], sizes = [8, 32], strides = [1, 1]} : vector<8x96xf32> to vector<8x32xf32>
    %388 = vector.extract_strided_slice %383 {offsets = [0, 64], sizes = [8, 32], strides = [1, 1]} : vector<8x96xf32> to vector<8x32xf32>
    %389 = arith.mulf %386, %344 : vector<8x32xf32>
    %390 = arith.mulf %387, %385 : vector<8x32xf32>
    %391 = arith.addf %389, %390 : vector<8x32xf32>
    %392 = math.tanh %391 : vector<8x32xf32>
    %393 = arith.mulf %388, %392 : vector<8x32xf32>
    %394 = arith.index_cast %350 : i32 to index
    %c0_87 = arith.constant 0 : index
    %395 = vector.load %arg16[%394, %c0_87] : memref<64x32xf32, #tpu.memory_space<vmem>>, vector<8x32xf32>
    tpu.vector_store %arg16[%394, %c0_87], %393 {strides = array<i32>} : memref<64x32xf32, #tpu.memory_space<vmem>>, vector<8x32xf32>,
    %c8_i32_88 = arith.constant 8 : i32
    %c0_89 = arith.constant 0 : index
    %c0_90 = arith.constant 0 : index
    %396 = vector.load %arg11[%c0_89, %c0_90] : memref<8x32xf32, #tpu.memory_space<vmem>>, vector<8x32xf32>
    tpu.vector_store %arg11[%c0_89, %c0_90], %373 {strides = array<i32>} : memref<8x32xf32, #tpu.memory_space<vmem>>, vector<8x32xf32>,
    %c0_91 = arith.constant 0 : index
    %c0_92 = arith.constant 0 : index
    %397 = vector.load %arg12[%c0_91, %c0_92] : memref<8x32xf32, #tpu.memory_space<vmem>>, vector<8x32xf32>
    tpu.vector_store %arg12[%c0_91, %c0_92], %371 {strides = array<i32>} : memref<8x32xf32, #tpu.memory_space<vmem>>, vector<8x32xf32>,
    %c0_93 = arith.constant 0 : index
    %c0_94 = arith.constant 0 : index
    %398 = vector.load %arg13[%c0_93, %c0_94] : memref<8x32xf32, #tpu.memory_space<vmem>>, vector<8x32xf32>
    tpu.vector_store %arg13[%c0_93, %c0_94], %393 {strides = array<i32>} : memref<8x32xf32, #tpu.memory_space<vmem>>, vector<8x32xf32>,
    %c0_95 = arith.constant 0 : index
    %c0_96 = arith.constant 0 : index
    %399 = vector.load %arg14[%c0_95, %c0_96] : memref<8x32xf32, #tpu.memory_space<vmem>>, vector<8x32xf32>
    tpu.vector_store %arg14[%c0_95, %c0_96], %391 {strides = array<i32>} : memref<8x32xf32, #tpu.memory_space<vmem>>, vector<8x32xf32>,
    %c0_97 = arith.constant 0 : index
    %c0_98 = arith.constant 0 : index
    %400 = vector.load %arg16[%c0_97, %c0_98] : memref<64x32xf32, #tpu.memory_space<vmem>>, vector<64x32xf32>
    %401 = arith.truncf %400 : vector<64x32xf32> to vector<64x32xbf16>
    %c0_99 = arith.constant 0 : index
    %c0_100 = arith.constant 0 : index
    %402 = vector.load %arg8[%c0_99, %c0_100] : memref<32x128xbf16, #tpu.memory_space<vmem>>, vector<32x128xbf16>
    %cst_101 = arith.constant dense<0.000000e+00> : vector<64x128xf32>
    %403 = tpu.matmul %401, %402, %cst_101 {dimension_numbers = #tpu.dot_dimension_numbers<[1], [0], [0], [1], [0, 0, 1, 1], [], []>} : vector<64x32xbf16>, vector<32x128xbf16>, vector<64x128xf32> -> vector<64x128xf32>
    %c0_102 = arith.constant 0 : index
    %c0_103 = arith.constant 0 : index
    %404 = vector.load %arg9[%c0_102, %c0_103] : memref<1x128xf32, #tpu.memory_space<vmem>>, vector<1x128xf32>
    %405 = vector.broadcast %404 : vector<1x128xf32> to vector<64x128xf32>
    %406 = arith.addf %403, %405 : vector<64x128xf32>
    %c0_104 = arith.constant 0 : index
    %c0_105 = arith.constant 0 : index
    %407 = vector.load %arg10[%c0_104, %c0_105] : memref<64x128xf32, #tpu.memory_space<vmem>>, vector<64x128xf32>
    tpu.vector_store %arg10[%c0_104, %c0_105], %406 {strides = array<i32>} : memref<64x128xf32, #tpu.memory_space<vmem>>, vector<64x128xf32>,
    return
  }
  func.func @transform_0(%arg0: i32) -> (i32, i32) {
    %c0_i32 = arith.constant 0 : i32
    %c0_i32_0 = arith.constant 0 : i32
    return %arg0, %c0_i32 : i32, i32
  }
  func.func @transform_1(%arg0: i32) -> (i32, i32) {
    %c0_i32 = arith.constant 0 : i32
    %c0_i32_0 = arith.constant 0 : i32
    %c0_i32_1 = arith.constant 0 : i32
    return %c0_i32, %c0_i32_0 : i32, i32
  }
  func.func @transform_2(%arg0: i32) -> (i32, i32) {
    %c0_i32 = arith.constant 0 : i32
    %c0_i32_0 = arith.constant 0 : i32
    %c0_i32_1 = arith.constant 0 : i32
    return %c0_i32, %c0_i32_0 : i32, i32
  }
  func.func @transform_3(%arg0: i32) -> (i32, i32) {
    %c0_i32 = arith.constant 0 : i32
    %c0_i32_0 = arith.constant 0 : i32
    %c0_i32_1 = arith.constant 0 : i32
    return %c0_i32, %c0_i32_0 : i32, i32
  }
  func.func @transform_4(%arg0: i32) -> (i32, i32) {
    %c0_i32 = arith.constant 0 : i32
    %c0_i32_0 = arith.constant 0 : i32
    %c0_i32_1 = arith.constant 0 : i32
    return %c0_i32, %c0_i32_0 : i32, i32
  }
  func.func @transform_5(%arg0: i32) -> (i32, i32) {
    %c0_i32 = arith.constant 0 : i32
    %c0_i32_0 = arith.constant 0 : i32
    %c0_i32_1 = arith.constant 0 : i32
    return %c0_i32, %c0_i32_0 : i32, i32
  }
  func.func @transform_6(%arg0: i32) -> (i32, i32) {
    %c0_i32 = arith.constant 0 : i32
    %c0_i32_0 = arith.constant 0 : i32
    %c0_i32_1 = arith.constant 0 : i32
    return %c0_i32, %c0_i32_0 : i32, i32
  }
  func.func @transform_7(%arg0: i32) -> (i32, i32) {
    %c0_i32 = arith.constant 0 : i32
    %c0_i32_0 = arith.constant 0 : i32
    %c0_i32_1 = arith.constant 0 : i32
    return %c0_i32, %c0_i32_0 : i32, i32
  }
  func.func @transform_8(%arg0: i32) -> (i32, i32) {
    %c0_i32 = arith.constant 0 : i32
    %c0_i32_0 = arith.constant 0 : i32
    %c0_i32_1 = arith.constant 0 : i32
    return %c0_i32, %c0_i32_0 : i32, i32
  }
  func.func @transform_9(%arg0: i32) -> (i32, i32) {
    %c0_i32 = arith.constant 0 : i32
    %c0_i32_0 = arith.constant 0 : i32
    return %arg0, %c0_i32 : i32, i32
  }
}

</mosaic_0001>

<llo_original>
// kernel: _lambda_.1
$region0: #{_lambda_.1}
  #allocation0 [shape = 'u32[]', space=smem, size = 0x4, offset = 0x4, fixed_abs, tag = 'smem constant byte address 0x4 - core index']
  #allocation1 [shape = 'u32[144,128]{1,0:T(1,128)}', space=vmem, size = 0x12000, scoped, tag = 'internal scratch']
  #allocation2 [shape = 'f32[8,32]{1,0:T(8,128)}', space=vmem, size = 0x1000, scoped, tag = 'scratch operand']
  #allocation3 [shape = 'f32[8,32]{1,0:T(8,128)}', space=vmem, size = 0x1000, scoped, tag = 'scratch operand']
  #allocation4 [shape = 'f32[8,32]{1,0:T(8,128)}', space=vmem, size = 0x1000, scoped, tag = 'scratch operand']
  #allocation5 [shape = 'f32[8,32]{1,0:T(8,128)}', space=vmem, size = 0x1000, scoped, tag = 'scratch operand']
  #allocation6 [shape = 'f32[64,128]{1,0:T(8,128)}', space=vmem, size = 0x8000, scoped, tag = 'scratch operand']
  #allocation7 [shape = 'f32[64,32]{1,0:T(8,128)}', space=vmem, size = 0x8000, scoped, tag = 'scratch operand']
  %s0 = inlined_call_operand.vmem [shape: bf16[128,4], index: 0, kind: input, shape index: {}]
  %s1 = inlined_call_operand.vmem [shape: bf16[4,128], index: 1, kind: input, shape index: {}]
  %s2 = inlined_call_operand.vmem [shape: bf16[32,128], index: 2, kind: input, shape index: {}]
  %s3 = inlined_call_operand.vmem [shape: f32[1,128], index: 3, kind: input, shape index: {}]
  %s4 = inlined_call_operand.vmem [shape: bf16[32,128], index: 4, kind: input, shape index: {}]
  %s5 = inlined_call_operand.vmem [shape: bf16[32,128], index: 5, kind: input, shape index: {}]
  %s6 = inlined_call_operand.vmem [shape: f32[1,128], index: 6, kind: input, shape index: {}]
  %s7 = inlined_call_operand.vmem [shape: bf16[32,128], index: 7, kind: input, shape index: {}]
  %s8 = inlined_call_operand.vmem [shape: f32[1,128], index: 8, kind: input, shape index: {}]
  %s9 = inlined_call_operand.vmem [shape: f32[128,128], index: 9, kind: output, shape index: {}]
  %s10 = sld [smem:[#allocation0]]
  $region73: #{_lambda_.1} parent=0
    _
  %s12 = ssub.s32 1, %s10
  %s13 = scalar_select 0, %s12, %s10
  loop: start=0, step=1, limit=4
  $region2: #{_lambda_.1} parent=0 // loop_pre_header
    _
  $region3: #{_lambda_.1} parent=0 // loop_header
    %s15 = sphi 0, %s19
    %p16 = scmp.ge.s32.totalorder %s15, 4
    %s25 = sphi 0, %s27
    %s28 = sphi 0, %s25
    %s29 = sphi 0, %s28
    %s45 = sphi 0, %s29
    %s49 = sphi 0, %s49
    %s51 = sphi 0, %s49
    %s52 = sphi 0, %s51
    %s66 = sphi 0, %s52
    %s70 = sphi 0, %s70
    %s72 = sphi 0, %s70
    %s73 = sphi 0, %s72
    %s87 = sphi 0, %s73
    %s91 = sphi 0, %s91
    %s93 = sphi 0, %s91
    %s94 = sphi 0, %s93
    %s108 = sphi 0, %s94
    %s112 = sphi 0, %s112
    %s114 = sphi 0, %s112
    %s115 = sphi 0, %s114
    %s129 = sphi 0, %s115
    %s133 = sphi 0, %s133
    %s135 = sphi 0, %s133
    %s136 = sphi 0, %s135
    %s150 = sphi 0, %s136
    %s154 = sphi 0, %s154
    %s156 = sphi 0, %s154
    %s157 = sphi 0, %s156
    %s171 = sphi 0, %s157
    %s175 = sphi 0, %s175
    %s177 = sphi 0, %s175
    %s178 = sphi 0, %s177
    %s192 = sphi 0, %s178
    %s196 = sphi 0, %s196
    %s198 = sphi 0, %s196
    %s199 = sphi 0, %s198
    %s213 = sphi 0, %s199
    %s219 = sphi 0, %s221
    %s222 = sphi 0, %s219
    %s223 = sphi 0, %s222
    %s239 = sphi 0, %s223
  $region4: #{_lambda_.1} parent=0 // loop_header_branch
    %18 = sbr.rel (%p16) target = $region8
  $region5: #{_lambda_.1} parent=0 // loop_body
    %s20 = ssub.s32 %s15, 1
    %s21 = ssub.s32 %s15, 2
    %s22 = sadd.s32 %s15, 1
    %s23 = ssub.s32 %s15, %s22
    %p24 = scmp.eq.s32.totalorder %s23, 0
    %s26 = sadd.s32 %s25, 1
    %s27 = scalar_select %p24, %s25, %s26
    %p30 = pneg %p24
    %p31 = scmp.eq.s32.totalorder %s15, 1
    %p32 = por %p30, %p31
    %p33 = scmp.ne.s32.totalorder %s25, %s28
    %p34 = scmp.eq.s32.totalorder %s15, 0
    %p35 = por %p33, %p34
    %p36 = scmp.ne.s32.totalorder %s25, %s28
    %p37 = scmp.eq.s32.totalorder %s20, 1
    %p38 = por %p36, %p37
    %p39 = scmp.ne.s32.totalorder %s28, %s29
    %p40 = scmp.eq.s32.totalorder %s20, 0
    %p41 = por %p39, %p40
    %p42 = scmp.ne.s32.totalorder %s28, %s29
    %p43 = scmp.eq.s32.totalorder %s21, 1
    %p44 = por %p42, %p43
    %p46 = scmp.ne.s32.totalorder %s29, %s45
    %p47 = scmp.eq.s32.totalorder %s21, 0
    %p48 = por %p46, %p47
    %s50 = sadd.s32 %s49, 1
    %p53 = scmp.eq.s32.totalorder %s15, 1
    %p54 = scmp.ne.s32.totalorder %s49, %s51
    %p55 = scmp.eq.s32.totalorder %s15, 0
    %p56 = por %p54, %p55
    %p57 = scmp.ne.s32.totalorder %s49, %s51
    %p58 = scmp.eq.s32.totalorder %s20, 1
    %p59 = por %p57, %p58
    %p60 = scmp.ne.s32.totalorder %s51, %s52
    %p61 = scmp.eq.s32.totalorder %s20, 0
    %p62 = por %p60, %p61
    %p63 = scmp.ne.s32.totalorder %s51, %s52
    %p64 = scmp.eq.s32.totalorder %s21, 1
    %p65 = por %p63, %p64
    %p67 = scmp.ne.s32.totalorder %s52, %s66
    %p68 = scmp.eq.s32.totalorder %s21, 0
    %p69 = por %p67, %p68
    %s71 = sadd.s32 %s70, 1
    %p74 = scmp.eq.s32.totalorder %s15, 1
    %p75 = scmp.ne.s32.totalorder %s70, %s72
    %p76 = scmp.eq.s32.totalorder %s15, 0
    %p77 = por %p75, %p76
    %p78 = scmp.ne.s32.totalorder %s70, %s72
    %p79 = scmp.eq.s32.totalorder %s20, 1
    %p80 = por %p78, %p79
    %p81 = scmp.ne.s32.totalorder %s72, %s73
    %p82 = scmp.eq.s32.totalorder %s20, 0
    %p83 = por %p81, %p82
    %p84 = scmp.ne.s32.totalorder %s72, %s73
    %p85 = scmp.eq.s32.totalorder %s21, 1
    %p86 = por %p84, %p85
    %p88 = scmp.ne.s32.totalorder %s73, %s87
    %p89 = scmp.eq.s32.totalorder %s21, 0
    %p90 = por %p88, %p89
    %s92 = sadd.s32 %s91, 1
    %p95 = scmp.eq.s32.totalorder %s15, 1
    %p96 = scmp.ne.s32.totalorder %s91, %s93
    %p97 = scmp.eq.s32.totalorder %s15, 0
    %p98 = por %p96, %p97
    %p99 = scmp.ne.s32.totalorder %s91, %s93
    %p100 = scmp.eq.s32.totalorder %s20, 1
    %p101 = por %p99, %p100
    %p102 = scmp.ne.s32.totalorder %s93, %s94
    %p103 = scmp.eq.s32.totalorder %s20, 0
    %p104 = por %p102, %p103
    %p105 = scmp.ne.s32.totalorder %s93, %s94
    %p106 = scmp.eq.s32.totalorder %s21, 1
    %p107 = por %p105, %p106
    %p109 = scmp.ne.s32.totalorder %s94, %s108
    %p110 = scmp.eq.s32.totalorder %s21, 0
    %p111 = por %p109, %p110
    %s113 = sadd.s32 %s112, 1
    %p116 = scmp.eq.s32.totalorder %s15, 1
    %p117 = scmp.ne.s32.totalorder %s112, %s114
    %p118 = scmp.eq.s32.totalorder %s15, 0
    %p119 = por %p117, %p118
    %p120 = scmp.ne.s32.totalorder %s112, %s114
    %p121 = scmp.eq.s32.totalorder %s20, 1
    %p122 = por %p120, %p121
    %p123 = scmp.ne.s32.totalorder %s114, %s115
    %p124 = scmp.eq.s32.totalorder %s20, 0
    %p125 = por %p123, %p124
    %p126 = scmp.ne.s32.totalorder %s114, %s115
    %p127 = scmp.eq.s32.totalorder %s21, 1
    %p128 = por %p126, %p127
    %p130 = scmp.ne.s32.totalorder %s115, %s129
    %p131 = scmp.eq.s32.totalorder %s21, 0
    %p132 = por %p130, %p131
    %s134 = sadd.s32 %s133, 1
    %p137 = scmp.eq.s32.totalorder %s15, 1
    %p138 = scmp.ne.s32.totalorder %s133, %s135
    %p139 = scmp.eq.s32.totalorder %s15, 0
    %p140 = por %p138, %p139
    %p141 = scmp.ne.s32.totalorder %s133, %s135
    %p142 = scmp.eq.s32.totalorder %s20, 1
    %p143 = por %p141, %p142
    %p144 = scmp.ne.s32.totalorder %s135, %s136
    %p145 = scmp.eq.s32.totalorder %s20, 0
    %p146 = por %p144, %p145
    %p147 = scmp.ne.s32.totalorder %s135, %s136
    %p148 = scmp.eq.s32.totalorder %s21, 1
    %p149 = por %p147, %p148
    %p151 = scmp.ne.s32.totalorder %s136, %s150
    %p152 = scmp.eq.s32.totalorder %s21, 0
    %p153 = por %p151, %p152
    %s155 = sadd.s32 %s154, 1
    %p158 = scmp.eq.s32.totalorder %s15, 1
    %p159 = scmp.ne.s32.totalorder %s154, %s156
    %p160 = scmp.eq.s32.totalorder %s15, 0
    %p161 = por %p159, %p160
    %p162 = scmp.ne.s32.totalorder %s154, %s156
    %p163 = scmp.eq.s32.totalorder %s20, 1
    %p164 = por %p162, %p163
    %p165 = scmp.ne.s32.totalorder %s156, %s157
    %p166 = scmp.eq.s32.totalorder %s20, 0
    %p167 = por %p165, %p166
    %p168 = scmp.ne.s32.totalorder %s156, %s157
    %p169 = scmp.eq.s32.totalorder %s21, 1
    %p170 = por %p168, %p169
    %p172 = scmp.ne.s32.totalorder %s157, %s171
    %p173 = scmp.eq.s32.totalorder %s21, 0
    %p174 = por %p172, %p173
    %s176 = sadd.s32 %s175, 1
    %p179 = scmp.eq.s32.totalorder %s15, 1
    %p180 = scmp.ne.s32.totalorder %s175, %s177
    %p181 = scmp.eq.s32.totalorder %s15, 0
    %p182 = por %p180, %p181
    %p183 = scmp.ne.s32.totalorder %s175, %s177
    %p184 = scmp.eq.s32.totalorder %s20, 1
    %p185 = por %p183, %p184
    %p186 = scmp.ne.s32.totalorder %s177, %s178
    %p187 = scmp.eq.s32.totalorder %s20, 0
    %p188 = por %p186, %p187
    %p189 = scmp.ne.s32.totalorder %s177, %s178
    %p190 = scmp.eq.s32.totalorder %s21, 1
    %p191 = por %p189, %p190
    %p193 = scmp.ne.s32.totalorder %s178, %s192
    %p194 = scmp.eq.s32.totalorder %s21, 0
    %p195 = por %p193, %p194
    %s197 = sadd.s32 %s196, 1
    %p200 = scmp.eq.s32.totalorder %s15, 1
    %p201 = scmp.ne.s32.totalorder %s196, %s198
    %p202 = scmp.eq.s32.totalorder %s15, 0
    %p203 = por %p201, %p202
    %p204 = scmp.ne.s32.totalorder %s196, %s198
    %p205 = scmp.eq.s32.totalorder %s20, 1
    %p206 = por %p204, %p205
    %p207 = scmp.ne.s32.totalorder %s198, %s199
    %p208 = scmp.eq.s32.totalorder %s20, 0
    %p209 = por %p207, %p208
    %p210 = scmp.ne.s32.totalorder %s198, %s199
    %p211 = scmp.eq.s32.totalorder %s21, 1
    %p212 = por %p210, %p211
    %p214 = scmp.ne.s32.totalorder %s199, %s213
    %p215 = scmp.eq.s32.totalorder %s21, 0
    %p216 = por %p214, %p215
    %s217 = ssub.s32 %s15, %s22
    %p218 = scmp.eq.s32.totalorder %s217, 0
    %s220 = sadd.s32 %s219, 1
    %s221 = scalar_select %p218, %s219, %s220
    %p224 = pneg %p218
    %p225 = scmp.eq.s32.totalorder %s15, 1
    %p226 = por %p224, %p225
    %p227 = scmp.ne.s32.totalorder %s219, %s222
    %p228 = scmp.eq.s32.totalorder %s15, 0
    %p229 = por %p227, %p228
    %p230 = scmp.ne.s32.totalorder %s219, %s222
    %p231 = scmp.eq.s32.totalorder %s20, 1
    %p232 = por %p230, %p231
    %p233 = scmp.ne.s32.totalorder %s222, %s223
    %p234 = scmp.eq.s32.totalorder %s20, 0
    %p235 = por %p233, %p234
    %p236 = scmp.ne.s32.totalorder %s222, %s223
    %p237 = scmp.eq.s32.totalorder %s21, 1
    %p238 = por %p236, %p237
    %p240 = scmp.ne.s32.totalorder %s223, %s239
    %p241 = scmp.eq.s32.totalorder %s21, 0
    %p242 = por %p240, %p241
    %p243 = scmp.le.s32.totalorder 1, %s15
    %p244 = scmp.lt.s32.totalorder %s15, 3
    %p245 = pnand %p243, %p244
    %p246 = pneg %p245
    // Predicated region
    $region9: #{_lambda_.1} parent=5 // pred_check
      _
    $region10: #{_lambda_.1} parent=5 // pred_check_branch
      %248 = sbr.rel (%p245) target = $region12
    $region11: #{_lambda_.1} parent=5 // pred_region
      %s249 = ssub.s32 %s15, 1
      // Predicated region
      $region13: #{_lambda_.1} parent=11 // pred_check
        %p250 = pneg %p62
      $region14: #{_lambda_.1} parent=11 // pred_check_branch
        %252 = sbr.rel (%p250) target = $region16
      $region15: #{_lambda_.1} parent=11 // pred_region
        _
      $region16: #{_lambda_.1} parent=11 // pred_fallthru
        _
      // Predicated region
      $region17: #{_lambda_.1} parent=11 // pred_check
        %p253 = pneg %p83
      $region18: #{_lambda_.1} parent=11 // pred_check_branch
        %255 = sbr.rel (%p253) target = $region20
      $region19: #{_lambda_.1} parent=11 // pred_region
        _
      $region20: #{_lambda_.1} parent=11 // pred_fallthru
        _
      // Predicated region
      $region21: #{_lambda_.1} parent=11 // pred_check
        %p256 = pneg %p104
      $region22: #{_lambda_.1} parent=11 // pred_check_branch
        %258 = sbr.rel (%p256) target = $region24
      $region23: #{_lambda_.1} parent=11 // pred_region
        _
      $region24: #{_lambda_.1} parent=11 // pred_fallthru
        _
      // Predicated region
      $region25: #{_lambda_.1} parent=11 // pred_check
        %p259 = pneg %p125
      $region26: #{_lambda_.1} parent=11 // pred_check_branch
        %261 = sbr.rel (%p259) target = $region28
      $region27: #{_lambda_.1} parent=11 // pred_region
        _
      $region28: #{_lambda_.1} parent=11 // pred_fallthru
        _
      // Predicated region
      $region29: #{_lambda_.1} parent=11 // pred_check
        %p262 = pneg %p146
      $region30: #{_lambda_.1} parent=11 // pred_check_branch
        %264 = sbr.rel (%p262) target = $region32
      $region31: #{_lambda_.1} parent=11 // pred_region
        _
      $region32: #{_lambda_.1} parent=11 // pred_fallthru
        _
      // Predicated region
      $region33: #{_lambda_.1} parent=11 // pred_check
        %p265 = pneg %p167
      $region34: #{_lambda_.1} parent=11 // pred_check_branch
        %267 = sbr.rel (%p265) target = $region36
      $region35: #{_lambda_.1} parent=11 // pred_region
        _
      $region36: #{_lambda_.1} parent=11 // pred_fallthru
        _
      // Predicated region
      $region37: #{_lambda_.1} parent=11 // pred_check
        %p268 = pneg %p188
      $region38: #{_lambda_.1} parent=11 // pred_check_branch
        %270 = sbr.rel (%p268) target = $region40
      $region39: #{_lambda_.1} parent=11 // pred_region
        _
      $region40: #{_lambda_.1} parent=11 // pred_fallthru
        _
      // Predicated region
      $region41: #{_lambda_.1} parent=11 // pred_check
        %p271 = pneg %p209
      $region42: #{_lambda_.1} parent=11 // pred_check_branch
        %273 = sbr.rel (%p271) target = $region44
      $region43: #{_lambda_.1} parent=11 // pred_region
        _
      $region44: #{_lambda_.1} parent=11 // pred_fallthru
        _
    $region12: #{_lambda_.1} parent=5 // pred_fallthru
      _
    %p274 = scmp.lt.s32.totalorder %s15, 2
    // Predicated region
    $region45: #{_lambda_.1} parent=5 // pred_check
      %p275 = pneg %p274
    $region46: #{_lambda_.1} parent=5 // pred_check_branch
      %277 = sbr.rel (%p275) target = $region48
    $region47: #{_lambda_.1} parent=5 // pred_region
      // Predicated region
      $region49: #{_lambda_.1} parent=47 // pred_check
        %p278 = pneg %p35
      $region50: #{_lambda_.1} parent=47 // pred_check_branch
        %280 = sbr.rel (%p278) target = $region52
      $region51: #{_lambda_.1} parent=47 // pred_region
        %s281 = smul.u32 8, %s15
        %p282 = scmp.lt.s32.totalorder %s281, 15
        %s283 = scalar_select %p282, %s281, 15
        %s284 = smul.addr %s283, 4
        %s285 = scalar_lea.vmem %s0, %s284
        %s286 = smul.u32 8, %s15
      $region52: #{_lambda_.1} parent=47 // pred_fallthru
        _
    $region48: #{_lambda_.1} parent=5 // pred_fallthru
      _
    %p287 = scmp.le.s32.totalorder 1, %s15
    %p288 = scmp.lt.s32.totalorder %s15, 3
    %p289 = pnand %p287, %p288
    %p290 = pneg %p289
    // Predicated region
    $region53: #{_lambda_.1} parent=5 // pred_check
      _
    $region54: #{_lambda_.1} parent=5 // pred_check_branch
      %292 = sbr.rel (%p289) target = $region56
    $region55: #{_lambda_.1} parent=5 // pred_region
      %s293 = ssub.s32 %s15, 1
      %s294 = smul.u32 8, %s20
      %p295 = scmp.lt.s32.totalorder %s294, 15
      %s296 = scalar_select %p295, %s294, 15
      %s297 = smul.addr %s296, 4
      %s298 = scalar_lea.vmem %s0, %s297
      %p299 = pneg %p41
      %p300 = pneg %p38
      %p301 = pneg %p62
      %p302 = pneg %p59
      %p303 = pneg %p83
      %p304 = pneg %p80
      %p305 = pneg %p104
      %p306 = pneg %p101
      %p307 = pneg %p125
      %p308 = pneg %p122
      %p309 = pneg %p146
      %p310 = pneg %p143
      %p311 = pneg %p167
      %p312 = pneg %p164
      %p313 = pneg %p188
      %p314 = pneg %p185
      %p315 = pneg %p209
      %p316 = pneg %p206
      %p317 = pneg %p235
      %p318 = pneg %p232
      %s319 = smul.u32 8, %s20
      %p320 = scmp.lt.s32.totalorder %s319, 15
      %s321 = scalar_select %p320, %s319, 15
      %s322 = smul.addr %s321, 8
      %s323 = scalar_lea.vmem %s9, %s322
      %s324 = smul.u32 8, %s20
      %p325 = scmp.lt.s32.totalorder %s324, 15
      %s326 = scalar_select %p325, %s324, 15
      %s327 = smul.addr %s326, 4
      %s328 = scalar_lea.vmem %s0, %s327
      %s329 = smul.u32 8, %s20
      %s330 = smul.u32 8, %s20
      %p331 = scmp.lt.s32.totalorder %s330, 15
      %s332 = scalar_select %p331, %s330, 15
      %s333 = smul.addr %s332, 8
      %s334 = scalar_lea.vmem %s9, %s333
      %s335 = smul.u32 8, %s20
      %p337 = scmp.eq.s32.totalorder %s20, 0
      // Predicated region
      $region57: #{_lambda_.1} parent=55 // pred_check
        %p338 = pneg %p337
      $region58: #{_lambda_.1} parent=55 // pred_check_branch
        %340 = sbr.rel (%p338) target = $region60
      $region59: #{_lambda_.1} parent=55 // pred_region
        %vm341 = vcmask 261120
        %342 = vst.msk [vmem:[#allocation2] sm:$0xff] %vm341, 0.0
        %343 = vst.msk [vmem:[#allocation3] sm:$0xff] %vm341, 0.0
        %344 = vst.msk [vmem:[#allocation4] sm:$0xff] %vm341, 0.0
        %345 = vst.msk [vmem:[#allocation5] sm:$0xff] %vm341, 0.0
      $region60: #{_lambda_.1} parent=55 // pred_fallthru
        _
      %v346 = vld [vmem:[%s328] sm:$0xf]
      %v347 = vld [vmem:[%s328 + $0x4] sm:$0xf]
      %v348 = vld [vmem:[%s328 + $0x8] sm:$0xf]
      %v349 = vld [vmem:[%s328 + $0xc] sm:$0xf]
      %v350 = vld [vmem:[%s328 + $0x10] sm:$0xf]
      %v351 = vld [vmem:[%s328 + $0x14] sm:$0xf]
      %v352 = vld [vmem:[%s328 + $0x18] sm:$0xf]
      %v353 = vld [vmem:[%s328 + $0x1c] sm:$0xf]
      %v354 = vld [vmem:[%s1] sm:$0x3]
      %v355 = vld [vmem:[%s3] sm:$0x1]
      %v357 = vlaneseq
      %v358 = vshrl.u32 %v357, 7
      %v359 = vsub.s32 0, %v358
      %v360 = vrot.slane %v355, %v359
      %v370 = vunpack.c.l.b16 %v346
      %v371 = vunpack.c.l.b16 %v347
      %v372 = vunpack.c.l.b16 %v348
      %v373 = vunpack.c.l.b16 %v349
      %v374 = vunpack.c.l.b16 %v350
      %v375 = vunpack.c.l.b16 %v351
      %v376 = vunpack.c.l.b16 %v352
      %v377 = vunpack.c.l.b16 %v353
      %v378 = vpack.c.b16 %v371, %v370
      %v379 = vpack.c.b16 %v373, %v372
      %v380 = vpack.c.b16 %v375, %v374
      %v381 = vpack.c.b16 %v377, %v376
      %vm382 = vcmask 31744
      %v384 = vsel %vm382, %v378, 0
      %v387 = vsel %vm382, %v379, 0
      %v390 = vsel %vm382, %v380, 0
      %v393 = vsel %vm382, %v381, 0
      %vm395 = vcmask 1041408
      %v397 = vsel %vm395, %v354, 0
      %399 = vmatprep.subr.bf16.mxu0 0
      %400 = vmatpush1.bf16.msra.mxu0 %v397
      %401 = vmatprep.subr.bf16.mxu0 0
      %402 = vmatpush1.bf16.msra.mxu0 0
      %403 = vmatprep.subr.bf16.mxu0 0
      %404 = vmatpush1.bf16.msra.mxu0 0
      %405 = vmatprep.subr.bf16.mxu0 0
      %406 = vmatpush1.bf16.msra.mxu0 0
      %407 = vmatprep.subr.bf16.mxu0 0
      %408 = vmatpush1.bf16.msra.mxu0 0
      %409 = vmatprep.subr.bf16.mxu0 0
      %410 = vmatpush1.bf16.msra.mxu0 0
      %411 = vmatprep.subr.bf16.mxu0 0
      %412 = vmatpush1.bf16.msra.mxu0 0
      %413 = vmatprep.subr.bf16.mxu0 0
      %414 = vmatpush1.bf16.msra.mxu0 0
      %415 = vmatprep.subr.bf16.mxu0 0
      %416 = vmatpush1.bf16.msra.mxu0 0
      %417 = vmatprep.subr.bf16.mxu0 0
      %418 = vmatpush1.bf16.msra.mxu0 0
      %419 = vmatprep.subr.bf16.mxu0 0
      %420 = vmatpush1.bf16.msra.mxu0 0
      %421 = vmatprep.subr.bf16.mxu0 0
      %422 = vmatpush1.bf16.msra.mxu0 0
      %423 = vmatprep.subr.bf16.mxu0 0
      %424 = vmatpush1.bf16.msra.mxu0 0
      %425 = vmatprep.subr.bf16.mxu0 0
      %426 = vmatpush1.bf16.msra.mxu0 0
      %427 = vmatprep.subr.bf16.mxu0 0
      %428 = vmatpush1.bf16.msra.mxu0 0
      %429 = vmatprep.subr.bf16.mxu0 0
      %430 = vmatpush1.bf16.msra.mxu0 0
      %431 = vmatprep.mubr.bf16.mxu0 0
      %432 = vmatmul.mubr.bf16.gmra.mrb[0].mxu0 %v384
      %v433 = vpop.f32.mrb[0].mxu0
      %v434 = vadd.f32 %v360, %v433
      %v435 = vpop.f32.mrb[0].mxu0
      %v436 = vpop.f32.mrb[0].mxu0
      %v437 = vadd.f32 %v360, %v436
      %v438 = vpop.f32.mrb[0].mxu0
      %439 = vmatprep.mubr.bf16.mxu0 0
      %440 = vmatmul.mubr.bf16.gmra.mrb[0].mxu0 %v387
      %v441 = vpop.f32.mrb[0].mxu0
      %v442 = vadd.f32 %v360, %v441
      %v443 = vpop.f32.mrb[0].mxu0
      %v444 = vpop.f32.mrb[0].mxu0
      %v445 = vadd.f32 %v360, %v444
      %v446 = vpop.f32.mrb[0].mxu0
      %447 = vmatprep.mubr.bf16.mxu0 0
      %448 = vmatmul.mubr.bf16.gmra.mrb[0].mxu0 %v390
      %v449 = vpop.f32.mrb[0].mxu0
      %v450 = vadd.f32 %v360, %v449
      %v451 = vpop.f32.mrb[0].mxu0
      %v452 = vpop.f32.mrb[0].mxu0
      %v453 = vadd.f32 %v360, %v452
      %v454 = vpop.f32.mrb[0].mxu0
      %455 = vmatprep.mubr.bf16.mxu0 0
      %456 = vmatmul.mubr.bf16.gmra.mrb[0].mxu0 %v393
      %v457 = vpop.f32.mrb[0].mxu0
      %v458 = vadd.f32 %v360, %v457
      %v459 = vpop.f32.mrb[0].mxu0
      %v460 = vpop.f32.mrb[0].mxu0
      %v461 = vadd.f32 %v360, %v460
      %v462 = vpop.f32.mrb[0].mxu0
      %463 = vdwg.mxu0
      %464 = vst [vmem:[#allocation6] sm:$0xff] %v434
      %465 = vst [vmem:[#allocation6 + $0x8] sm:$0xff] %v437
      %466 = vst [vmem:[#allocation6 + $0x10] sm:$0xff] %v442
      %467 = vst [vmem:[#allocation6 + $0x18] sm:$0xff] %v445
      %468 = vst [vmem:[#allocation6 + $0x20] sm:$0xff] %v450
      %469 = vst [vmem:[#allocation6 + $0x28] sm:$0xff] %v453
      %470 = vst [vmem:[#allocation6 + $0x30] sm:$0xff] %v458
      %471 = vst [vmem:[#allocation6 + $0x38] sm:$0xff] %v461
      %v472 = vld [vmem:[%s2] sm:$0xf]
      %v473 = vld [vmem:[%s2 + $0x4] sm:$0xf]
      %v474 = vld [vmem:[%s2 + $0x8] sm:$0xf]
      %v475 = vld [vmem:[%s2 + $0xc] sm:$0xf]
      %v476 = vld [vmem:[%s4] sm:$0xf]
      %v477 = vld [vmem:[%s4 + $0x4] sm:$0xf]
      %v478 = vld [vmem:[%s4 + $0x8] sm:$0xf]
      %v479 = vld [vmem:[%s4 + $0xc] sm:$0xf]
      %v480 = vld [vmem:[%s5] sm:$0xf]
      %v481 = vld [vmem:[%s5 + $0x4] sm:$0xf]
      %v482 = vld [vmem:[%s5 + $0x8] sm:$0xf]
      %v483 = vld [vmem:[%s5 + $0xc] sm:$0xf]
      %v484 = vld [vmem:[%s6] sm:$0x1]
      %v486 = vlaneseq
      %v487 = vshrl.u32 %v486, 7
      %v488 = vsub.s32 0, %v487
      %v489 = vrot.slane %v484, %v488
      %v491 = vld [vmem:[#allocation2] sm:$0xff]
      %v492 = vld [vmem:[#allocation3] sm:$0xff]
      %v493 = vld [vmem:[#allocation4] sm:$0xff]
      %v494 = vld [vmem:[#allocation5] sm:$0xff]
      %v495 = vpack.c.bf16 %v493, %v493
      %v496 = vld [vmem:[#allocation6] sm:$0xff]
      %v497 = vpack.c.bf16 %v491, %v491
      %v502 = vunpack.c.l.b16 %v472
      %v503 = vunpack.c.l.b16 %v473
      %v504 = vunpack.c.l.b16 %v474
      %v505 = vunpack.c.l.b16 %v475
      %v506 = vpack.c.b16 %v503, %v502
      %v507 = vpack.c.b16 %v505, %v504
      %vm510 = vcmask 261120
      %v512 = vsel %vm510, %v497, 0
      %514 = vmatprep.subr.bf16.mxu0 0
      %515 = vmatpush1.bf16.msra.mxu0 %v506
      %516 = vmatprep.subr.bf16.mxu0 0
      %517 = vmatpush1.bf16.msra.mxu0 %v507
      %518 = vmatprep.subr.bf16.mxu0 0
      %519 = vmatpush1.bf16.msra.mxu0 0
      %520 = vmatprep.subr.bf16.mxu0 0
      %521 = vmatpush1.bf16.msra.mxu0 0
      %522 = vmatprep.subr.bf16.mxu0 0
      %523 = vmatpush1.bf16.msra.mxu0 0
      %524 = vmatprep.subr.bf16.mxu0 0
      %525 = vmatpush1.bf16.msra.mxu0 0
      %526 = vmatprep.subr.bf16.mxu0 0
      %527 = vmatpush1.bf16.msra.mxu0 0
      %528 = vmatprep.subr.bf16.mxu0 0
      %529 = vmatpush1.bf16.msra.mxu0 0
      %530 = vmatprep.subr.bf16.mxu0 0
      %531 = vmatpush1.bf16.msra.mxu0 0
      %532 = vmatprep.subr.bf16.mxu0 0
      %533 = vmatpush1.bf16.msra.mxu0 0
      %534 = vmatprep.subr.bf16.mxu0 0
      %535 = vmatpush1.bf16.msra.mxu0 0
      %536 = vmatprep.subr.bf16.mxu0 0
      %537 = vmatpush1.bf16.msra.mxu0 0
      %538 = vmatprep.subr.bf16.mxu0 0
      %539 = vmatpush1.bf16.msra.mxu0 0
      %540 = vmatprep.subr.bf16.mxu0 0
      %541 = vmatpush1.bf16.msra.mxu0 0
      %542 = vmatprep.subr.bf16.mxu0 0
      %543 = vmatpush1.bf16.msra.mxu0 0
      %544 = vmatprep.subr.bf16.mxu0 0
      %545 = vmatpush1.bf16.msra.mxu0 0
      %546 = vmatprep.mubr.bf16.mxu0 0
      %547 = vmatmul.mubr.bf16.gmra.mrb[0].mxu0 %v512
      %v548 = vpop.f32.mrb[0].mxu0
      %v549 = vadd.f32 0.0, %v548
      %v550 = vpop.f32.mrb[0].mxu0
      %v551 = vpop.f32.mrb[0].mxu0
      %v552 = vpop.f32.mrb[0].mxu0
      %553 = vdwg.mxu0
      %v554 = vadd.f32 %v496, %v549
      %v555 = vxor.u32 %v554, 2147483648
      %v556 = vmul.f32 %v555, 1.442695
      %v557 = vpow.pop %v556
      %v558 = vadd.f32 %v557, 1.0
      %v559 = vrcp.pop %v558
      %v560 = vmul.f32 1.0, %v559
      %v561 = vtanh.pop %v554
      %v562 = vmul.f32 %v560, %v492
      %564 = vrot.lane.b32.xlu0 %v561, 64
      %v565 = vpop.permute.xlu0 %564
      %v567 = vmul.f32 %v560, %v565
      %569 = vrot.lane.b32.xlu0 %v567, 96
      %v570 = vpop.permute.xlu0 %569
      %v572 = vadd.f32 %v562, %v570
      %v573 = vtanh.pop %v572
      %575 = vrot.lane.b32.xlu0 %v573, 64
      %v576 = vpop.permute.xlu0 %575
      %v578 = vmul.f32 %v560, %v576
      %v579 = vpack.c.bf16 %v578, %v578
      %581 = vrot.lane.b32.xlu0 %v579, 64
      %v582 = vpop.permute.xlu0 %581
      %v587 = vunpack.c.l.b16 %v476
      %v588 = vunpack.c.l.b16 %v477
      %v589 = vunpack.c.l.b16 %v478
      %v590 = vunpack.c.l.b16 %v479
      %v591 = vpack.c.b16 %v588, %v587
      %v592 = vpack.c.b16 %v590, %v589
      %v596 = vsel %vm510, %v582, 0
      %598 = vmatprep.subr.bf16.mxu0 0
      %599 = vmatpush1.bf16.msra.mxu0 %v591
      %600 = vmatprep.subr.bf16.mxu0 0
      %601 = vmatpush1.bf16.msra.mxu0 %v592
      %602 = vmatprep.subr.bf16.mxu0 0
      %603 = vmatpush1.bf16.msra.mxu0 0
      %604 = vmatprep.subr.bf16.mxu0 0
      %605 = vmatpush1.bf16.msra.mxu0 0
      %606 = vmatprep.subr.bf16.mxu0 0
      %607 = vmatpush1.bf16.msra.mxu0 0
      %608 = vmatprep.subr.bf16.mxu0 0
      %609 = vmatpush1.bf16.msra.mxu0 0
      %610 = vmatprep.subr.bf16.mxu0 0
      %611 = vmatpush1.bf16.msra.mxu0 0
      %612 = vmatprep.subr.bf16.mxu0 0
      %613 = vmatpush1.bf16.msra.mxu0 0
      %614 = vmatprep.subr.bf16.mxu0 0
      %615 = vmatpush1.bf16.msra.mxu0 0
      %616 = vmatprep.subr.bf16.mxu0 0
      %617 = vmatpush1.bf16.msra.mxu0 0
      %618 = vmatprep.subr.bf16.mxu0 0
      %619 = vmatpush1.bf16.msra.mxu0 0
      %620 = vmatprep.subr.bf16.mxu0 0
      %621 = vmatpush1.bf16.msra.mxu0 0
      %622 = vmatprep.subr.bf16.mxu0 0
      %623 = vmatpush1.bf16.msra.mxu0 0
      %624 = vmatprep.subr.bf16.mxu0 0
      %625 = vmatpush1.bf16.msra.mxu0 0
      %626 = vmatprep.subr.bf16.mxu0 0
      %627 = vmatpush1.bf16.msra.mxu0 0
      %628 = vmatprep.subr.bf16.mxu0 0
      %629 = vmatpush1.bf16.msra.mxu0 0
      %630 = vmatprep.mubr.bf16.mxu0 0
      %631 = vmatmul.mubr.bf16.gmra.mrb[0].mxu0 %v596
      %v632 = vpop.f32.mrb[0].mxu0
      %v633 = vadd.f32 0.0, %v632
      %v634 = vpop.f32.mrb[0].mxu0
      %v635 = vpop.f32.mrb[0].mxu0
      %v636 = vpop.f32.mrb[0].mxu0
      %637 = vdwg.mxu0
      %v642 = vunpack.c.l.b16 %v480
      %v643 = vunpack.c.l.b16 %v481
      %v644 = vunpack.c.l.b16 %v482
      %v645 = vunpack.c.l.b16 %v483
      %v646 = vpack.c.b16 %v643, %v642
      %v647 = vpack.c.b16 %v645, %v644
      %v651 = vsel %vm510, %v495, 0
      %653 = vmatprep.subr.bf16.mxu0 0
      %654 = vmatpush1.bf16.msra.mxu0 %v646
      %655 = vmatprep.subr.bf16.mxu0 0
      %656 = vmatpush1.bf16.msra.mxu0 %v647
      %657 = vmatprep.subr.bf16.mxu0 0
      %658 = vmatpush1.bf16.msra.mxu0 0
      %659 = vmatprep.subr.bf16.mxu0 0
      %660 = vmatpush1.bf16.msra.mxu0 0
      %661 = vmatprep.subr.bf16.mxu0 0
      %662 = vmatpush1.bf16.msra.mxu0 0
      %663 = vmatprep.subr.bf16.mxu0 0
      %664 = vmatpush1.bf16.msra.mxu0 0
      %665 = vmatprep.subr.bf16.mxu0 0
      %666 = vmatpush1.bf16.msra.mxu0 0
      %667 = vmatprep.subr.bf16.mxu0 0
      %668 = vmatpush1.bf16.msra.mxu0 0
      %669 = vmatprep.subr.bf16.mxu0 0
      %670 = vmatpush1.bf16.msra.mxu0 0
      %671 = vmatprep.subr.bf16.mxu0 0
      %672 = vmatpush1.bf16.msra.mxu0 0
      %673 = vmatprep.subr.bf16.mxu0 0
      %674 = vmatpush1.bf16.msra.mxu0 0
      %675 = vmatprep.subr.bf16.mxu0 0
      %676 = vmatpush1.bf16.msra.mxu0 0
      %677 = vmatprep.subr.bf16.mxu0 0
      %678 = vmatpush1.bf16.msra.mxu0 0
      %679 = vmatprep.subr.bf16.mxu0 0
      %680 = vmatpush1.bf16.msra.mxu0 0
      %681 = vmatprep.subr.bf16.mxu0 0
      %682 = vmatpush1.bf16.msra.mxu0 0
      %683 = vmatprep.subr.bf16.mxu0 0
      %684 = vmatpush1.bf16.msra.mxu0 0
      %685 = vmatprep.mubr.bf16.mxu0 0
      %686 = vmatmul.mubr.bf16.gmra.mrb[0].mxu0 %v651
      %v687 = vpop.f32.mrb[0].mxu0
      %v688 = vadd.f32 %v633, %v687
      %v689 = vpop.f32.mrb[0].mxu0
      %v690 = vpop.f32.mrb[0].mxu0
      %v691 = vpop.f32.mrb[0].mxu0
      %692 = vdwg.mxu0
      %v693 = vadd.f32 %v688, %v489
      %v694 = vxor.u32 %v693, 2147483648
      %v695 = vmul.f32 %v694, 1.442695
      %v696 = vpow.pop %v695
      %v697 = vadd.f32 %v696, 1.0
      %v698 = vrcp.pop %v697
      %v699 = vmul.f32 1.0, %v698
      %v700 = vtanh.pop %v693
      %v701 = vmul.f32 %v699, %v494
      %703 = vrot.lane.b32.xlu0 %v700, 64
      %v704 = vpop.permute.xlu0 %703
      %v706 = vmul.f32 %v699, %v704
      %708 = vrot.lane.b32.xlu0 %v706, 96
      %v709 = vpop.permute.xlu0 %708
      %v711 = vadd.f32 %v701, %v709
      %v712 = vtanh.pop %v711
      %714 = vrot.lane.b32.xlu0 %v712, 64
      %v715 = vpop.permute.xlu0 %714
      %v717 = vmul.f32 %v699, %v715
      %719 = vrot.lane.b32.xlu0 %v717, 64
      %v720 = vpop.permute.xlu0 %719
      %722 = vst.msk [vmem:[#allocation7] sm:$0xff] %vm510, %v720
      %v723 = vpack.c.bf16 %v717, %v717
      %s724 = scalar_lea.vmem [#allocation6], 8
      %v725 = vld [vmem:[%s724] sm:$0xff]
      %726 = vmatprep.subr.bf16.mxu0 0
      %727 = vmatpush1.bf16.msra.mxu0 %v506
      %728 = vmatprep.subr.bf16.mxu0 0
      %729 = vmatpush1.bf16.msra.mxu0 %v507
      %730 = vmatprep.subr.bf16.mxu0 0
      %731 = vmatpush1.bf16.msra.mxu0 0
      %732 = vmatprep.subr.bf16.mxu0 0
      %733 = vmatpush1.bf16.msra.mxu0 0
      %734 = vmatprep.subr.bf16.mxu0 0
      %735 = vmatpush1.bf16.msra.mxu0 0
      %736 = vmatprep.subr.bf16.mxu0 0
      %737 = vmatpush1.bf16.msra.mxu0 0
      %738 = vmatprep.subr.bf16.mxu0 0
      %739 = vmatpush1.bf16.msra.mxu0 0
      %740 = vmatprep.subr.bf16.mxu0 0
      %741 = vmatpush1.bf16.msra.mxu0 0
      %742 = vmatprep.subr.bf16.mxu0 0
      %743 = vmatpush1.bf16.msra.mxu0 0
      %744 = vmatprep.subr.bf16.mxu0 0
      %745 = vmatpush1.bf16.msra.mxu0 0
      %746 = vmatprep.subr.bf16.mxu0 0
      %747 = vmatpush1.bf16.msra.mxu0 0
      %748 = vmatprep.subr.bf16.mxu0 0
      %749 = vmatpush1.bf16.msra.mxu0 0
      %750 = vmatprep.subr.bf16.mxu0 0
      %751 = vmatpush1.bf16.msra.mxu0 0
      %752 = vmatprep.subr.bf16.mxu0 0
      %753 = vmatpush1.bf16.msra.mxu0 0
      %754 = vmatprep.subr.bf16.mxu0 0
      %755 = vmatpush1.bf16.msra.mxu0 0
      %756 = vmatprep.subr.bf16.mxu0 0
      %757 = vmatpush1.bf16.msra.mxu0 0
      %758 = vmatprep.mubr.bf16.mxu0 0
      %759 = vmatmul.mubr.bf16.gmra.mrb[0].mxu0 %v596
      %v760 = vpop.f32.mrb[0].mxu0
      %v761 = vadd.f32 0.0, %v760
      %v762 = vpop.f32.mrb[0].mxu0
      %v763 = vpop.f32.mrb[0].mxu0
      %v764 = vpop.f32.mrb[0].mxu0
      %765 = vdwg.mxu0
      %v766 = vadd.f32 %v725, %v761
      %v767 = vxor.u32 %v766, 2147483648
      %v768 = vmul.f32 %v767, 1.442695
      %v769 = vpow.pop %v768
      %v770 = vadd.f32 %v769, 1.0
      %v771 = vrcp.pop %v770
      %v772 = vmul.f32 1.0, %v771
      %v773 = vtanh.pop %v766
      %v774 = vmul.f32 %v772, %v572
      %776 = vrot.lane.b32.xlu0 %v773, 64
      %v777 = vpop.permute.xlu0 %776
      %v779 = vmul.f32 %v772, %v777
      %781 = vrot.lane.b32.xlu0 %v779, 96
      %v782 = vpop.permute.xlu0 %781
      %v784 = vadd.f32 %v774, %v782
      %v785 = vtanh.pop %v784
      %787 = vrot.lane.b32.xlu0 %v785, 64
      %v788 = vpop.permute.xlu0 %787
      %v790 = vmul.f32 %v772, %v788
      %v791 = vpack.c.bf16 %v790, %v790
      %793 = vrot.lane.b32.xlu0 %v791, 64
      %v794 = vpop.permute.xlu0 %793
      %v796 = vsel %vm510, %v794, 0
      %798 = vmatprep.subr.bf16.mxu0 0
      %799 = vmatpush1.bf16.msra.mxu0 %v591
      %800 = vmatprep.subr.bf16.mxu0 0
      %801 = vmatpush1.bf16.msra.mxu0 %v592
      %802 = vmatprep.subr.bf16.mxu0 0
      %803 = vmatpush1.bf16.msra.mxu0 0
      %804 = vmatprep.subr.bf16.mxu0 0
      %805 = vmatpush1.bf16.msra.mxu0 0
      %806 = vmatprep.subr.bf16.mxu0 0
      %807 = vmatpush1.bf16.msra.mxu0 0
      %808 = vmatprep.subr.bf16.mxu0 0
      %809 = vmatpush1.bf16.msra.mxu0 0
      %810 = vmatprep.subr.bf16.mxu0 0
      %811 = vmatpush1.bf16.msra.mxu0 0
      %812 = vmatprep.subr.bf16.mxu0 0
      %813 = vmatpush1.bf16.msra.mxu0 0
      %814 = vmatprep.subr.bf16.mxu0 0
      %815 = vmatpush1.bf16.msra.mxu0 0
      %816 = vmatprep.subr.bf16.mxu0 0
      %817 = vmatpush1.bf16.msra.mxu0 0
      %818 = vmatprep.subr.bf16.mxu0 0
      %819 = vmatpush1.bf16.msra.mxu0 0
      %820 = vmatprep.subr.bf16.mxu0 0
      %821 = vmatpush1.bf16.msra.mxu0 0
      %822 = vmatprep.subr.bf16.mxu0 0
      %823 = vmatpush1.bf16.msra.mxu0 0
      %824 = vmatprep.subr.bf16.mxu0 0
      %825 = vmatpush1.bf16.msra.mxu0 0
      %826 = vmatprep.subr.bf16.mxu0 0
      %827 = vmatpush1.bf16.msra.mxu0 0
      %828 = vmatprep.subr.bf16.mxu0 0
      %829 = vmatpush1.bf16.msra.mxu0 0
      %830 = vmatprep.mubr.bf16.mxu0 0
      %831 = vmatmul.mubr.bf16.gmra.mrb[0].mxu0 %v796
      %v832 = vpop.f32.mrb[0].mxu0
      %v833 = vadd.f32 0.0, %v832
      %v834 = vpop.f32.mrb[0].mxu0
      %v835 = vpop.f32.mrb[0].mxu0
      %v836 = vpop.f32.mrb[0].mxu0
      %837 = vdwg.mxu0
      %839 = vrot.lane.b32.xlu0 %v723, 64
      %v840 = vpop.permute.xlu0 %839
      %v842 = vsel %vm510, %v840, 0
      %844 = vmatprep.subr.bf16.mxu0 0
      %845 = vmatpush1.bf16.msra.mxu0 %v646
      %846 = vmatprep.subr.bf16.mxu0 0
      %847 = vmatpush1.bf16.msra.mxu0 %v647
      %848 = vmatprep.subr.bf16.mxu0 0
      %849 = vmatpush1.bf16.msra.mxu0 0
      %850 = vmatprep.subr.bf16.mxu0 0
      %851 = vmatpush1.bf16.msra.mxu0 0
      %852 = vmatprep.subr.bf16.mxu0 0
      %853 = vmatpush1.bf16.msra.mxu0 0
      %854 = vmatprep.subr.bf16.mxu0 0
      %855 = vmatpush1.bf16.msra.mxu0 0
      %856 = vmatprep.subr.bf16.mxu0 0
      %857 = vmatpush1.bf16.msra.mxu0 0
      %858 = vmatprep.subr.bf16.mxu0 0
      %859 = vmatpush1.bf16.msra.mxu0 0
      %860 = vmatprep.subr.bf16.mxu0 0
      %861 = vmatpush1.bf16.msra.mxu0 0
      %862 = vmatprep.subr.bf16.mxu0 0
      %863 = vmatpush1.bf16.msra.mxu0 0
      %864 = vmatprep.subr.bf16.mxu0 0
      %865 = vmatpush1.bf16.msra.mxu0 0
      %866 = vmatprep.subr.bf16.mxu0 0
      %867 = vmatpush1.bf16.msra.mxu0 0
      %868 = vmatprep.subr.bf16.mxu0 0
      %869 = vmatpush1.bf16.msra.mxu0 0
      %870 = vmatprep.subr.bf16.mxu0 0
      %871 = vmatpush1.bf16.msra.mxu0 0
      %872 = vmatprep.subr.bf16.mxu0 0
      %873 = vmatpush1.bf16.msra.mxu0 0
      %874 = vmatprep.subr.bf16.mxu0 0
      %875 = vmatpush1.bf16.msra.mxu0 0
      %876 = vmatprep.mubr.bf16.mxu0 0
      %877 = vmatmul.mubr.bf16.gmra.mrb[0].mxu0 %v842
      %v878 = vpop.f32.mrb[0].mxu0
      %v879 = vadd.f32 %v833, %v878
      %v880 = vpop.f32.mrb[0].mxu0
      %v881 = vpop.f32.mrb[0].mxu0
      %v882 = vpop.f32.mrb[0].mxu0
      %883 = vdwg.mxu0
      %v884 = vadd.f32 %v879, %v489
      %v885 = vxor.u32 %v884, 2147483648
      %v886 = vmul.f32 %v885, 1.442695
      %v887 = vpow.pop %v886
      %v888 = vadd.f32 %v887, 1.0
      %v889 = vrcp.pop %v888
      %v890 = vmul.f32 1.0, %v889
      %v891 = vtanh.pop %v884
      %v892 = vmul.f32 %v890, %v711
      %894 = vrot.lane.b32.xlu0 %v891, 64
      %v895 = vpop.permute.xlu0 %894
      %v897 = vmul.f32 %v890, %v895
      %899 = vrot.lane.b32.xlu0 %v897, 96
      %v900 = vpop.permute.xlu0 %899
      %v902 = vadd.f32 %v892, %v900
      %v903 = vtanh.pop %v902
      %905 = vrot.lane.b32.xlu0 %v903, 64
      %v906 = vpop.permute.xlu0 %905
      %v908 = vmul.f32 %v890, %v906
      %910 = vrot.lane.b32.xlu0 %v908, 64
      %v911 = vpop.permute.xlu0 %910
      %s913 = scalar_lea.vmem [#allocation7], 8
      %914 = vst.msk [vmem:[%s913] sm:$0xff] %vm510, %v911
      %v915 = vpack.c.bf16 %v908, %v908
      %s916 = scalar_lea.vmem [#allocation6], 16
      %v917 = vld [vmem:[%s916] sm:$0xff]
      %918 = vmatprep.subr.bf16.mxu0 0
      %919 = vmatpush1.bf16.msra.mxu0 %v506
      %920 = vmatprep.subr.bf16.mxu0 0
      %921 = vmatpush1.bf16.msra.mxu0 %v507
      %922 = vmatprep.subr.bf16.mxu0 0
      %923 = vmatpush1.bf16.msra.mxu0 0
      %924 = vmatprep.subr.bf16.mxu0 0
      %925 = vmatpush1.bf16.msra.mxu0 0
      %926 = vmatprep.subr.bf16.mxu0 0
      %927 = vmatpush1.bf16.msra.mxu0 0
      %928 = vmatprep.subr.bf16.mxu0 0
      %929 = vmatpush1.bf16.msra.mxu0 0
      %930 = vmatprep.subr.bf16.mxu0 0
      %931 = vmatpush1.bf16.msra.mxu0 0
      %932 = vmatprep.subr.bf16.mxu0 0
      %933 = vmatpush1.bf16.msra.mxu0 0
      %934 = vmatprep.subr.bf16.mxu0 0
      %935 = vmatpush1.bf16.msra.mxu0 0
      %936 = vmatprep.subr.bf16.mxu0 0
      %937 = vmatpush1.bf16.msra.mxu0 0
      %938 = vmatprep.subr.bf16.mxu0 0
      %939 = vmatpush1.bf16.msra.mxu0 0
      %940 = vmatprep.subr.bf16.mxu0 0
      %941 = vmatpush1.bf16.msra.mxu0 0
      %942 = vmatprep.subr.bf16.mxu0 0
      %943 = vmatpush1.bf16.msra.mxu0 0
      %944 = vmatprep.subr.bf16.mxu0 0
      %945 = vmatpush1.bf16.msra.mxu0 0
      %946 = vmatprep.subr.bf16.mxu0 0
      %947 = vmatpush1.bf16.msra.mxu0 0
      %948 = vmatprep.subr.bf16.mxu0 0
      %949 = vmatpush1.bf16.msra.mxu0 0
      %950 = vmatprep.mubr.bf16.mxu0 0
      %951 = vmatmul.mubr.bf16.gmra.mrb[0].mxu0 %v796
      %v952 = vpop.f32.mrb[0].mxu0
      %v953 = vadd.f32 0.0, %v952
      %v954 = vpop.f32.mrb[0].mxu0
      %v955 = vpop.f32.mrb[0].mxu0
      %v956 = vpop.f32.mrb[0].mxu0
      %957 = vdwg.mxu0
      %v958 = vadd.f32 %v917, %v953
      %v959 = vxor.u32 %v958, 2147483648
      %v960 = vmul.f32 %v959, 1.442695
      %v961 = vpow.pop %v960
      %v962 = vadd.f32 %v961, 1.0
      %v963 = vrcp.pop %v962
      %v964 = vmul.f32 1.0, %v963
      %v965 = vtanh.pop %v958
      %v966 = vmul.f32 %v964, %v784
      %968 = vrot.lane.b32.xlu0 %v965, 64
      %v969 = vpop.permute.xlu0 %968
      %v971 = vmul.f32 %v964, %v969
      %973 = vrot.lane.b32.xlu0 %v971, 96
      %v974 = vpop.permute.xlu0 %973
      %v976 = vadd.f32 %v966, %v974
      %v977 = vtanh.pop %v976
      %979 = vrot.lane.b32.xlu0 %v977, 64
      %v980 = vpop.permute.xlu0 %979
      %v982 = vmul.f32 %v964, %v980
      %v983 = vpack.c.bf16 %v982, %v982
      %985 = vrot.lane.b32.xlu0 %v983, 64
      %v986 = vpop.permute.xlu0 %985
      %v988 = vsel %vm510, %v986, 0
      %990 = vmatprep.subr.bf16.mxu0 0
      %991 = vmatpush1.bf16.msra.mxu0 %v591
      %992 = vmatprep.subr.bf16.mxu0 0
      %993 = vmatpush1.bf16.msra.mxu0 %v592
      %994 = vmatprep.subr.bf16.mxu0 0
      %995 = vmatpush1.bf16.msra.mxu0 0
      %996 = vmatprep.subr.bf16.mxu0 0
      %997 = vmatpush1.bf16.msra.mxu0 0
      %998 = vmatprep.subr.bf16.mxu0 0
      %999 = vmatpush1.bf16.msra.mxu0 0
      %1000 = vmatprep.subr.bf16.mxu0 0
      %1001 = vmatpush1.bf16.msra.mxu0 0
      %1002 = vmatprep.subr.bf16.mxu0 0
      %1003 = vmatpush1.bf16.msra.mxu0 0
      %1004 = vmatprep.subr.bf16.mxu0 0
      %1005 = vmatpush1.bf16.msra.mxu0 0
      %1006 = vmatprep.subr.bf16.mxu0 0
      %1007 = vmatpush1.bf16.msra.mxu0 0
      %1008 = vmatprep.subr.bf16.mxu0 0
      %1009 = vmatpush1.bf16.msra.mxu0 0
      %1010 = vmatprep.subr.bf16.mxu0 0
      %1011 = vmatpush1.bf16.msra.mxu0 0
      %1012 = vmatprep.subr.bf16.mxu0 0
      %1013 = vmatpush1.bf16.msra.mxu0 0
      %1014 = vmatprep.subr.bf16.mxu0 0
      %1015 = vmatpush1.bf16.msra.mxu0 0
      %1016 = vmatprep.subr.bf16.mxu0 0
      %1017 = vmatpush1.bf16.msra.mxu0 0
      %1018 = vmatprep.subr.bf16.mxu0 0
      %1019 = vmatpush1.bf16.msra.mxu0 0
      %1020 = vmatprep.subr.bf16.mxu0 0
      %1021 = vmatpush1.bf16.msra.mxu0 0
      %1022 = vmatprep.mubr.bf16.mxu0 0
      %1023 = vmatmul.mubr.bf16.gmra.mrb[0].mxu0 %v988
      %v1024 = vpop.f32.mrb[0].mxu0
      %v1025 = vadd.f32 0.0, %v1024
      %v1026 = vpop.f32.mrb[0].mxu0
      %v1027 = vpop.f32.mrb[0].mxu0
      %v1028 = vpop.f32.mrb[0].mxu0
      %1029 = vdwg.mxu0
      %1031 = vrot.lane.b32.xlu0 %v915, 64
      %v1032 = vpop.permute.xlu0 %1031
      %v1034 = vsel %vm510, %v1032, 0
      %1036 = vmatprep.subr.bf16.mxu0 0
      %1037 = vmatpush1.bf16.msra.mxu0 %v646
      %1038 = vmatprep.subr.bf16.mxu0 0
      %1039 = vmatpush1.bf16.msra.mxu0 %v647
      %1040 = vmatprep.subr.bf16.mxu0 0
      %1041 = vmatpush1.bf16.msra.mxu0 0
      %1042 = vmatprep.subr.bf16.mxu0 0
      %1043 = vmatpush1.bf16.msra.mxu0 0
      %1044 = vmatprep.subr.bf16.mxu0 0
      %1045 = vmatpush1.bf16.msra.mxu0 0
      %1046 = vmatprep.subr.bf16.mxu0 0
      %1047 = vmatpush1.bf16.msra.mxu0 0
      %1048 = vmatprep.subr.bf16.mxu0 0
      %1049 = vmatpush1.bf16.msra.mxu0 0
      %1050 = vmatprep.subr.bf16.mxu0 0
      %1051 = vmatpush1.bf16.msra.mxu0 0
      %1052 = vmatprep.subr.bf16.mxu0 0
      %1053 = vmatpush1.bf16.msra.mxu0 0
      %1054 = vmatprep.subr.bf16.mxu0 0
      %1055 = vmatpush1.bf16.msra.mxu0 0
      %1056 = vmatprep.subr.bf16.mxu0 0
      %1057 = vmatpush1.bf16.msra.mxu0 0
      %1058 = vmatprep.subr.bf16.mxu0 0
      %1059 = vmatpush1.bf16.msra.mxu0 0
      %1060 = vmatprep.subr.bf16.mxu0 0
      %1061 = vmatpush1.bf16.msra.mxu0 0
      %1062 = vmatprep.subr.bf16.mxu0 0
      %1063 = vmatpush1.bf16.msra.mxu0 0
      %1064 = vmatprep.subr.bf16.mxu0 0
      %1065 = vmatpush1.bf16.msra.mxu0 0
      %1066 = vmatprep.subr.bf16.mxu0 0
      %1067 = vmatpush1.bf16.msra.mxu0 0
      %1068 = vmatprep.mubr.bf16.mxu0 0
      %1069 = vmatmul.mubr.bf16.gmra.mrb[0].mxu0 %v1034
      %v1070 = vpop.f32.mrb[0].mxu0
      %v1071 = vadd.f32 %v1025, %v1070
      %v1072 = vpop.f32.mrb[0].mxu0
      %v1073 = vpop.f32.mrb[0].mxu0
      %v1074 = vpop.f32.mrb[0].mxu0
      %1075 = vdwg.mxu0
      %v1076 = vadd.f32 %v1071, %v489
      %v1077 = vxor.u32 %v1076, 2147483648
      %v1078 = vmul.f32 %v1077, 1.442695
      %v1079 = vpow.pop %v1078
      %v1080 = vadd.f32 %v1079, 1.0
      %v1081 = vrcp.pop %v1080
      %v1082 = vmul.f32 1.0, %v1081
      %v1083 = vtanh.pop %v1076
      %v1084 = vmul.f32 %v1082, %v902
      %1086 = vrot.lane.b32.xlu0 %v1083, 64
      %v1087 = vpop.permute.xlu0 %1086
      %v1089 = vmul.f32 %v1082, %v1087
      %1091 = vrot.lane.b32.xlu0 %v1089, 96
      %v1092 = vpop.permute.xlu0 %1091
      %v1094 = vadd.f32 %v1084, %v1092
      %v1095 = vtanh.pop %v1094
      %1097 = vrot.lane.b32.xlu0 %v1095, 64
      %v1098 = vpop.permute.xlu0 %1097
      %v1100 = vmul.f32 %v1082, %v1098
      %1102 = vrot.lane.b32.xlu0 %v1100, 64
      %v1103 = vpop.permute.xlu0 %1102
      %s1105 = scalar_lea.vmem [#allocation7], 16
      %1106 = vst.msk [vmem:[%s1105] sm:$0xff] %vm510, %v1103
      %v1107 = vpack.c.bf16 %v1100, %v1100
      %s1108 = scalar_lea.vmem [#allocation6], 24
      %v1109 = vld [vmem:[%s1108] sm:$0xff]
      %1110 = vmatprep.subr.bf16.mxu0 0
      %1111 = vmatpush1.bf16.msra.mxu0 %v506
      %1112 = vmatprep.subr.bf16.mxu0 0
      %1113 = vmatpush1.bf16.msra.mxu0 %v507
      %1114 = vmatprep.subr.bf16.mxu0 0
      %1115 = vmatpush1.bf16.msra.mxu0 0
      %1116 = vmatprep.subr.bf16.mxu0 0
      %1117 = vmatpush1.bf16.msra.mxu0 0
      %1118 = vmatprep.subr.bf16.mxu0 0
      %1119 = vmatpush1.bf16.msra.mxu0 0
      %1120 = vmatprep.subr.bf16.mxu0 0
      %1121 = vmatpush1.bf16.msra.mxu0 0
      %1122 = vmatprep.subr.bf16.mxu0 0
      %1123 = vmatpush1.bf16.msra.mxu0 0
      %1124 = vmatprep.subr.bf16.mxu0 0
      %1125 = vmatpush1.bf16.msra.mxu0 0
      %1126 = vmatprep.subr.bf16.mxu0 0
      %1127 = vmatpush1.bf16.msra.mxu0 0
      %1128 = vmatprep.subr.bf16.mxu0 0
      %1129 = vmatpush1.bf16.msra.mxu0 0
      %1130 = vmatprep.subr.bf16.mxu0 0
      %1131 = vmatpush1.bf16.msra.mxu0 0
      %1132 = vmatprep.subr.bf16.mxu0 0
      %1133 = vmatpush1.bf16.msra.mxu0 0
      %1134 = vmatprep.subr.bf16.mxu0 0
      %1135 = vmatpush1.bf16.msra.mxu0 0
      %1136 = vmatprep.subr.bf16.mxu0 0
      %1137 = vmatpush1.bf16.msra.mxu0 0
      %1138 = vmatprep.subr.bf16.mxu0 0
      %1139 = vmatpush1.bf16.msra.mxu0 0
      %1140 = vmatprep.subr.bf16.mxu0 0
      %1141 = vmatpush1.bf16.msra.mxu0 0
      %1142 = vmatprep.mubr.bf16.mxu0 0
      %1143 = vmatmul.mubr.bf16.gmra.mrb[0].mxu0 %v988
      %v1144 = vpop.f32.mrb[0].mxu0
      %v1145 = vadd.f32 0.0, %v1144
      %v1146 = vpop.f32.mrb[0].mxu0
      %v1147 = vpop.f32.mrb[0].mxu0
      %v1148 = vpop.f32.mrb[0].mxu0
      %1149 = vdwg.mxu0
      %v1150 = vadd.f32 %v1109, %v1145
      %v1151 = vxor.u32 %v1150, 2147483648
      %v1152 = vmul.f32 %v1151, 1.442695
      %v1153 = vpow.pop %v1152
      %v1154 = vadd.f32 %v1153, 1.0
      %v1155 = vrcp.pop %v1154
      %v1156 = vmul.f32 1.0, %v1155
      %v1157 = vtanh.pop %v1150
      %v1158 = vmul.f32 %v1156, %v976
      %1160 = vrot.lane.b32.xlu0 %v1157, 64
      %v1161 = vpop.permute.xlu0 %1160
      %v1163 = vmul.f32 %v1156, %v1161
      %1165 = vrot.lane.b32.xlu0 %v1163, 96
      %v1166 = vpop.permute.xlu0 %1165
      %v1168 = vadd.f32 %v1158, %v1166
      %v1169 = vtanh.pop %v1168
      %1171 = vrot.lane.b32.xlu0 %v1169, 64
      %v1172 = vpop.permute.xlu0 %1171
      %v1174 = vmul.f32 %v1156, %v1172
      %v1175 = vpack.c.bf16 %v1174, %v1174
      %1177 = vrot.lane.b32.xlu0 %v1175, 64
      %v1178 = vpop.permute.xlu0 %1177
      %v1180 = vsel %vm510, %v1178, 0
      %1182 = vmatprep.subr.bf16.mxu0 0
      %1183 = vmatpush1.bf16.msra.mxu0 %v591
      %1184 = vmatprep.subr.bf16.mxu0 0
      %1185 = vmatpush1.bf16.msra.mxu0 %v592
      %1186 = vmatprep.subr.bf16.mxu0 0
      %1187 = vmatpush1.bf16.msra.mxu0 0
      %1188 = vmatprep.subr.bf16.mxu0 0
      %1189 = vmatpush1.bf16.msra.mxu0 0
      %1190 = vmatprep.subr.bf16.mxu0 0
      %1191 = vmatpush1.bf16.msra.mxu0 0
      %1192 = vmatprep.subr.bf16.mxu0 0
      %1193 = vmatpush1.bf16.msra.mxu0 0
      %1194 = vmatprep.subr.bf16.mxu0 0
      %1195 = vmatpush1.bf16.msra.mxu0 0
      %1196 = vmatprep.subr.bf16.mxu0 0
      %1197 = vmatpush1.bf16.msra.mxu0 0
      %1198 = vmatprep.subr.bf16.mxu0 0
      %1199 = vmatpush1.bf16.msra.mxu0 0
      %1200 = vmatprep.subr.bf16.mxu0 0
      %1201 = vmatpush1.bf16.msra.mxu0 0
      %1202 = vmatprep.subr.bf16.mxu0 0
      %1203 = vmatpush1.bf16.msra.mxu0 0
      %1204 = vmatprep.subr.bf16.mxu0 0
      %1205 = vmatpush1.bf16.msra.mxu0 0
      %1206 = vmatprep.subr.bf16.mxu0 0
      %1207 = vmatpush1.bf16.msra.mxu0 0
      %1208 = vmatprep.subr.bf16.mxu0 0
      %1209 = vmatpush1.bf16.msra.mxu0 0
      %1210 = vmatprep.subr.bf16.mxu0 0
      %1211 = vmatpush1.bf16.msra.mxu0 0
      %1212 = vmatprep.subr.bf16.mxu0 0
      %1213 = vmatpush1.bf16.msra.mxu0 0
      %1214 = vmatprep.mubr.bf16.mxu0 0
      %1215 = vmatmul.mubr.bf16.gmra.mrb[0].mxu0 %v1180
      %v1216 = vpop.f32.mrb[0].mxu0
      %v1217 = vadd.f32 0.0, %v1216
      %v1218 = vpop.f32.mrb[0].mxu0
      %v1219 = vpop.f32.mrb[0].mxu0
      %v1220 = vpop.f32.mrb[0].mxu0
      %1221 = vdwg.mxu0
      %1223 = vrot.lane.b32.xlu0 %v1107, 64
      %v1224 = vpop.permute.xlu0 %1223
      %v1226 = vsel %vm510, %v1224, 0
      %1228 = vmatprep.subr.bf16.mxu0 0
      %1229 = vmatpush1.bf16.msra.mxu0 %v646
      %1230 = vmatprep.subr.bf16.mxu0 0
      %1231 = vmatpush1.bf16.msra.mxu0 %v647
      %1232 = vmatprep.subr.bf16.mxu0 0
      %1233 = vmatpush1.bf16.msra.mxu0 0
      %1234 = vmatprep.subr.bf16.mxu0 0
      %1235 = vmatpush1.bf16.msra.mxu0 0
      %1236 = vmatprep.subr.bf16.mxu0 0
      %1237 = vmatpush1.bf16.msra.mxu0 0
      %1238 = vmatprep.subr.bf16.mxu0 0
      %1239 = vmatpush1.bf16.msra.mxu0 0
      %1240 = vmatprep.subr.bf16.mxu0 0
      %1241 = vmatpush1.bf16.msra.mxu0 0
      %1242 = vmatprep.subr.bf16.mxu0 0
      %1243 = vmatpush1.bf16.msra.mxu0 0
      %1244 = vmatprep.subr.bf16.mxu0 0
      %1245 = vmatpush1.bf16.msra.mxu0 0
      %1246 = vmatprep.subr.bf16.mxu0 0
      %1247 = vmatpush1.bf16.msra.mxu0 0
      %1248 = vmatprep.subr.bf16.mxu0 0
      %1249 = vmatpush1.bf16.msra.mxu0 0
      %1250 = vmatprep.subr.bf16.mxu0 0
      %1251 = vmatpush1.bf16.msra.mxu0 0
      %1252 = vmatprep.subr.bf16.mxu0 0
      %1253 = vmatpush1.bf16.msra.mxu0 0
      %1254 = vmatprep.subr.bf16.mxu0 0
      %1255 = vmatpush1.bf16.msra.mxu0 0
      %1256 = vmatprep.subr.bf16.mxu0 0
      %1257 = vmatpush1.bf16.msra.mxu0 0
      %1258 = vmatprep.subr.bf16.mxu0 0
      %1259 = vmatpush1.bf16.msra.mxu0 0
      %1260 = vmatprep.mubr.bf16.mxu0 0
      %1261 = vmatmul.mubr.bf16.gmra.mrb[0].mxu0 %v1226
      %v1262 = vpop.f32.mrb[0].mxu0
      %v1263 = vadd.f32 %v1217, %v1262
      %v1264 = vpop.f32.mrb[0].mxu0
      %v1265 = vpop.f32.mrb[0].mxu0
      %v1266 = vpop.f32.mrb[0].mxu0
      %1267 = vdwg.mxu0
      %v1268 = vadd.f32 %v1263, %v489
      %v1269 = vxor.u32 %v1268, 2147483648
      %v1270 = vmul.f32 %v1269, 1.442695
      %v1271 = vpow.pop %v1270
      %v1272 = vadd.f32 %v1271, 1.0
      %v1273 = vrcp.pop %v1272
      %v1274 = vmul.f32 1.0, %v1273
      %v1275 = vtanh.pop %v1268
      %v1276 = vmul.f32 %v1274, %v1094
      %1278 = vrot.lane.b32.xlu0 %v1275, 64
      %v1279 = vpop.permute.xlu0 %1278
      %v1281 = vmul.f32 %v1274, %v1279
      %1283 = vrot.lane.b32.xlu0 %v1281, 96
      %v1284 = vpop.permute.xlu0 %1283
      %v1286 = vadd.f32 %v1276, %v1284
      %v1287 = vtanh.pop %v1286
      %1289 = vrot.lane.b32.xlu0 %v1287, 64
      %v1290 = vpop.permute.xlu0 %1289
      %v1292 = vmul.f32 %v1274, %v1290
      %1294 = vrot.lane.b32.xlu0 %v1292, 64
      %v1295 = vpop.permute.xlu0 %1294
      %s1297 = scalar_lea.vmem [#allocation7], 24
      %1298 = vst.msk [vmem:[%s1297] sm:$0xff] %vm510, %v1295
      %v1299 = vpack.c.bf16 %v1292, %v1292
      %s1300 = scalar_lea.vmem [#allocation6], 32
      %v1301 = vld [vmem:[%s1300] sm:$0xff]
      %1302 = vmatprep.subr.bf16.mxu0 0
      %1303 = vmatpush1.bf16.msra.mxu0 %v506
      %1304 = vmatprep.subr.bf16.mxu0 0
      %1305 = vmatpush1.bf16.msra.mxu0 %v507
      %1306 = vmatprep.subr.bf16.mxu0 0
      %1307 = vmatpush1.bf16.msra.mxu0 0
      %1308 = vmatprep.subr.bf16.mxu0 0
      %1309 = vmatpush1.bf16.msra.mxu0 0
      %1310 = vmatprep.subr.bf16.mxu0 0
      %1311 = vmatpush1.bf16.msra.mxu0 0
      %1312 = vmatprep.subr.bf16.mxu0 0
      %1313 = vmatpush1.bf16.msra.mxu0 0
      %1314 = vmatprep.subr.bf16.mxu0 0
      %1315 = vmatpush1.bf16.msra.mxu0 0
      %1316 = vmatprep.subr.bf16.mxu0 0
      %1317 = vmatpush1.bf16.msra.mxu0 0
      %1318 = vmatprep.subr.bf16.mxu0 0
      %1319 = vmatpush1.bf16.msra.mxu0 0
      %1320 = vmatprep.subr.bf16.mxu0 0
      %1321 = vmatpush1.bf16.msra.mxu0 0
      %1322 = vmatprep.subr.bf16.mxu0 0
      %1323 = vmatpush1.bf16.msra.mxu0 0
      %1324 = vmatprep.subr.bf16.mxu0 0
      %1325 = vmatpush1.bf16.msra.mxu0 0
      %1326 = vmatprep.subr.bf16.mxu0 0
      %1327 = vmatpush1.bf16.msra.mxu0 0
      %1328 = vmatprep.subr.bf16.mxu0 0
      %1329 = vmatpush1.bf16.msra.mxu0 0
      %1330 = vmatprep.subr.bf16.mxu0 0
      %1331 = vmatpush1.bf16.msra.mxu0 0
      %1332 = vmatprep.subr.bf16.mxu0 0
      %1333 = vmatpush1.bf16.msra.mxu0 0
      %1334 = vmatprep.mubr.bf16.mxu0 0
      %1335 = vmatmul.mubr.bf16.gmra.mrb[0].mxu0 %v1180
      %v1336 = vpop.f32.mrb[0].mxu0
      %v1337 = vadd.f32 0.0, %v1336
      %v1338 = vpop.f32.mrb[0].mxu0
      %v1339 = vpop.f32.mrb[0].mxu0
      %v1340 = vpop.f32.mrb[0].mxu0
      %1341 = vdwg.mxu0
      %v1342 = vadd.f32 %v1301, %v1337
      %v1343 = vxor.u32 %v1342, 2147483648
      %v1344 = vmul.f32 %v1343, 1.442695
      %v1345 = vpow.pop %v1344
      %v1346 = vadd.f32 %v1345, 1.0
      %v1347 = vrcp.pop %v1346
      %v1348 = vmul.f32 1.0, %v1347
      %v1349 = vtanh.pop %v1342
      %v1350 = vmul.f32 %v1348, %v1168
      %1352 = vrot.lane.b32.xlu0 %v1349, 64
      %v1353 = vpop.permute.xlu0 %1352
      %v1355 = vmul.f32 %v1348, %v1353
      %1357 = vrot.lane.b32.xlu0 %v1355, 96
      %v1358 = vpop.permute.xlu0 %1357
      %v1360 = vadd.f32 %v1350, %v1358
      %v1361 = vtanh.pop %v1360
      %1363 = vrot.lane.b32.xlu0 %v1361, 64
      %v1364 = vpop.permute.xlu0 %1363
      %v1366 = vmul.f32 %v1348, %v1364
      %v1367 = vpack.c.bf16 %v1366, %v1366
      %1369 = vrot.lane.b32.xlu0 %v1367, 64
      %v1370 = vpop.permute.xlu0 %1369
      %v1372 = vsel %vm510, %v1370, 0
      %1374 = vmatprep.subr.bf16.mxu0 0
      %1375 = vmatpush1.bf16.msra.mxu0 %v591
      %1376 = vmatprep.subr.bf16.mxu0 0
      %1377 = vmatpush1.bf16.msra.mxu0 %v592
      %1378 = vmatprep.subr.bf16.mxu0 0
      %1379 = vmatpush1.bf16.msra.mxu0 0
      %1380 = vmatprep.subr.bf16.mxu0 0
      %1381 = vmatpush1.bf16.msra.mxu0 0
      %1382 = vmatprep.subr.bf16.mxu0 0
      %1383 = vmatpush1.bf16.msra.mxu0 0
      %1384 = vmatprep.subr.bf16.mxu0 0
      %1385 = vmatpush1.bf16.msra.mxu0 0
      %1386 = vmatprep.subr.bf16.mxu0 0
      %1387 = vmatpush1.bf16.msra.mxu0 0
      %1388 = vmatprep.subr.bf16.mxu0 0
      %1389 = vmatpush1.bf16.msra.mxu0 0
      %1390 = vmatprep.subr.bf16.mxu0 0
      %1391 = vmatpush1.bf16.msra.mxu0 0
      %1392 = vmatprep.subr.bf16.mxu0 0
      %1393 = vmatpush1.bf16.msra.mxu0 0
      %1394 = vmatprep.subr.bf16.mxu0 0
      %1395 = vmatpush1.bf16.msra.mxu0 0
      %1396 = vmatprep.subr.bf16.mxu0 0
      %1397 = vmatpush1.bf16.msra.mxu0 0
      %1398 = vmatprep.subr.bf16.mxu0 0
      %1399 = vmatpush1.bf16.msra.mxu0 0
      %1400 = vmatprep.subr.bf16.mxu0 0
      %1401 = vmatpush1.bf16.msra.mxu0 0
      %1402 = vmatprep.subr.bf16.mxu0 0
      %1403 = vmatpush1.bf16.msra.mxu0 0
      %1404 = vmatprep.subr.bf16.mxu0 0
      %1405 = vmatpush1.bf16.msra.mxu0 0
      %1406 = vmatprep.mubr.bf16.mxu0 0
      %1407 = vmatmul.mubr.bf16.gmra.mrb[0].mxu0 %v1372
      %v1408 = vpop.f32.mrb[0].mxu0
      %v1409 = vadd.f32 0.0, %v1408
      %v1410 = vpop.f32.mrb[0].mxu0
      %v1411 = vpop.f32.mrb[0].mxu0
      %v1412 = vpop.f32.mrb[0].mxu0
      %1413 = vdwg.mxu0
      %1415 = vrot.lane.b32.xlu0 %v1299, 64
      %v1416 = vpop.permute.xlu0 %1415
      %v1418 = vsel %vm510, %v1416, 0
      %1420 = vmatprep.subr.bf16.mxu0 0
      %1421 = vmatpush1.bf16.msra.mxu0 %v646
      %1422 = vmatprep.subr.bf16.mxu0 0
      %1423 = vmatpush1.bf16.msra.mxu0 %v647
      %1424 = vmatprep.subr.bf16.mxu0 0
      %1425 = vmatpush1.bf16.msra.mxu0 0
      %1426 = vmatprep.subr.bf16.mxu0 0
      %1427 = vmatpush1.bf16.msra.mxu0 0
      %1428 = vmatprep.subr.bf16.mxu0 0
      %1429 = vmatpush1.bf16.msra.mxu0 0
      %1430 = vmatprep.subr.bf16.mxu0 0
      %1431 = vmatpush1.bf16.msra.mxu0 0
      %1432 = vmatprep.subr.bf16.mxu0 0
      %1433 = vmatpush1.bf16.msra.mxu0 0
      %1434 = vmatprep.subr.bf16.mxu0 0
      %1435 = vmatpush1.bf16.msra.mxu0 0
      %1436 = vmatprep.subr.bf16.mxu0 0
      %1437 = vmatpush1.bf16.msra.mxu0 0
      %1438 = vmatprep.subr.bf16.mxu0 0
      %1439 = vmatpush1.bf16.msra.mxu0 0
      %1440 = vmatprep.subr.bf16.mxu0 0
      %1441 = vmatpush1.bf16.msra.mxu0 0
      %1442 = vmatprep.subr.bf16.mxu0 0
      %1443 = vmatpush1.bf16.msra.mxu0 0
      %1444 = vmatprep.subr.bf16.mxu0 0
      %1445 = vmatpush1.bf16.msra.mxu0 0
      %1446 = vmatprep.subr.bf16.mxu0 0
      %1447 = vmatpush1.bf16.msra.mxu0 0
      %1448 = vmatprep.subr.bf16.mxu0 0
      %1449 = vmatpush1.bf16.msra.mxu0 0
      %1450 = vmatprep.subr.bf16.mxu0 0
      %1451 = vmatpush1.bf16.msra.mxu0 0
      %1452 = vmatprep.mubr.bf16.mxu0 0
      %1453 = vmatmul.mubr.bf16.gmra.mrb[0].mxu0 %v1418
      %v1454 = vpop.f32.mrb[0].mxu0
      %v1455 = vadd.f32 %v1409, %v1454
      %v1456 = vpop.f32.mrb[0].mxu0
      %v1457 = vpop.f32.mrb[0].mxu0
      %v1458 = vpop.f32.mrb[0].mxu0
      %1459 = vdwg.mxu0
      %v1460 = vadd.f32 %v1455, %v489
      %v1461 = vxor.u32 %v1460, 2147483648
      %v1462 = vmul.f32 %v1461, 1.442695
      %v1463 = vpow.pop %v1462
      %v1464 = vadd.f32 %v1463, 1.0
      %v1465 = vrcp.pop %v1464
      %v1466 = vmul.f32 1.0, %v1465
      %v1467 = vtanh.pop %v1460
      %v1468 = vmul.f32 %v1466, %v1286
      %1470 = vrot.lane.b32.xlu0 %v1467, 64
      %v1471 = vpop.permute.xlu0 %1470
      %v1473 = vmul.f32 %v1466, %v1471
      %1475 = vrot.lane.b32.xlu0 %v1473, 96
      %v1476 = vpop.permute.xlu0 %1475
      %v1478 = vadd.f32 %v1468, %v1476
      %v1479 = vtanh.pop %v1478
      %1481 = vrot.lane.b32.xlu0 %v1479, 64
      %v1482 = vpop.permute.xlu0 %1481
      %v1484 = vmul.f32 %v1466, %v1482
      %1486 = vrot.lane.b32.xlu0 %v1484, 64
      %v1487 = vpop.permute.xlu0 %1486
      %s1489 = scalar_lea.vmem [#allocation7], 32
      %1490 = vst.msk [vmem:[%s1489] sm:$0xff] %vm510, %v1487
      %v1491 = vpack.c.bf16 %v1484, %v1484
      %s1492 = scalar_lea.vmem [#allocation6], 40
      %v1493 = vld [vmem:[%s1492] sm:$0xff]
      %1494 = vmatprep.subr.bf16.mxu0 0
      %1495 = vmatpush1.bf16.msra.mxu0 %v506
      %1496 = vmatprep.subr.bf16.mxu0 0
      %1497 = vmatpush1.bf16.msra.mxu0 %v507
      %1498 = vmatprep.subr.bf16.mxu0 0
      %1499 = vmatpush1.bf16.msra.mxu0 0
      %1500 = vmatprep.subr.bf16.mxu0 0
      %1501 = vmatpush1.bf16.msra.mxu0 0
      %1502 = vmatprep.subr.bf16.mxu0 0
      %1503 = vmatpush1.bf16.msra.mxu0 0
      %1504 = vmatprep.subr.bf16.mxu0 0
      %1505 = vmatpush1.bf16.msra.mxu0 0
      %1506 = vmatprep.subr.bf16.mxu0 0
      %1507 = vmatpush1.bf16.msra.mxu0 0
      %1508 = vmatprep.subr.bf16.mxu0 0
      %1509 = vmatpush1.bf16.msra.mxu0 0
      %1510 = vmatprep.subr.bf16.mxu0 0
      %1511 = vmatpush1.bf16.msra.mxu0 0
      %1512 = vmatprep.subr.bf16.mxu0 0
      %1513 = vmatpush1.bf16.msra.mxu0 0
      %1514 = vmatprep.subr.bf16.mxu0 0
      %1515 = vmatpush1.bf16.msra.mxu0 0
      %1516 = vmatprep.subr.bf16.mxu0 0
      %1517 = vmatpush1.bf16.msra.mxu0 0
      %1518 = vmatprep.subr.bf16.mxu0 0
      %1519 = vmatpush1.bf16.msra.mxu0 0
      %1520 = vmatprep.subr.bf16.mxu0 0
      %1521 = vmatpush1.bf16.msra.mxu0 0
      %1522 = vmatprep.subr.bf16.mxu0 0
      %1523 = vmatpush1.bf16.msra.mxu0 0
      %1524 = vmatprep.subr.bf16.mxu0 0
      %1525 = vmatpush1.bf16.msra.mxu0 0
      %1526 = vmatprep.mubr.bf16.mxu0 0
      %1527 = vmatmul.mubr.bf16.gmra.mrb[0].mxu0 %v1372
      %v1528 = vpop.f32.mrb[0].mxu0
      %v1529 = vadd.f32 0.0, %v1528
      %v1530 = vpop.f32.mrb[0].mxu0
      %v1531 = vpop.f32.mrb[0].mxu0
      %v1532 = vpop.f32.mrb[0].mxu0
      %1533 = vdwg.mxu0
      %v1534 = vadd.f32 %v1493, %v1529
      %v1535 = vxor.u32 %v1534, 2147483648
      %v1536 = vmul.f32 %v1535, 1.442695
      %v1537 = vpow.pop %v1536
      %v1538 = vadd.f32 %v1537, 1.0
      %v1539 = vrcp.pop %v1538
      %v1540 = vmul.f32 1.0, %v1539
      %v1541 = vtanh.pop %v1534
      %v1542 = vmul.f32 %v1540, %v1360
      %1544 = vrot.lane.b32.xlu0 %v1541, 64
      %v1545 = vpop.permute.xlu0 %1544
      %v1547 = vmul.f32 %v1540, %v1545
      %1549 = vrot.lane.b32.xlu0 %v1547, 96
      %v1550 = vpop.permute.xlu0 %1549
      %v1552 = vadd.f32 %v1542, %v1550
      %v1553 = vtanh.pop %v1552
      %1555 = vrot.lane.b32.xlu0 %v1553, 64
      %v1556 = vpop.permute.xlu0 %1555
      %v1558 = vmul.f32 %v1540, %v1556
      %v1559 = vpack.c.bf16 %v1558, %v1558
      %1561 = vrot.lane.b32.xlu0 %v1559, 64
      %v1562 = vpop.permute.xlu0 %1561
      %v1564 = vsel %vm510, %v1562, 0
      %1566 = vmatprep.subr.bf16.mxu0 0
      %1567 = vmatpush1.bf16.msra.mxu0 %v591
      %1568 = vmatprep.subr.bf16.mxu0 0
      %1569 = vmatpush1.bf16.msra.mxu0 %v592
      %1570 = vmatprep.subr.bf16.mxu0 0
      %1571 = vmatpush1.bf16.msra.mxu0 0
      %1572 = vmatprep.subr.bf16.mxu0 0
      %1573 = vmatpush1.bf16.msra.mxu0 0
      %1574 = vmatprep.subr.bf16.mxu0 0
      %1575 = vmatpush1.bf16.msra.mxu0 0
      %1576 = vmatprep.subr.bf16.mxu0 0
      %1577 = vmatpush1.bf16.msra.mxu0 0
      %1578 = vmatprep.subr.bf16.mxu0 0
      %1579 = vmatpush1.bf16.msra.mxu0 0
      %1580 = vmatprep.subr.bf16.mxu0 0
      %1581 = vmatpush1.bf16.msra.mxu0 0
      %1582 = vmatprep.subr.bf16.mxu0 0
      %1583 = vmatpush1.bf16.msra.mxu0 0
      %1584 = vmatprep.subr.bf16.mxu0 0
      %1585 = vmatpush1.bf16.msra.mxu0 0
      %1586 = vmatprep.subr.bf16.mxu0 0
      %1587 = vmatpush1.bf16.msra.mxu0 0
      %1588 = vmatprep.subr.bf16.mxu0 0
      %1589 = vmatpush1.bf16.msra.mxu0 0
      %1590 = vmatprep.subr.bf16.mxu0 0
      %1591 = vmatpush1.bf16.msra.mxu0 0
      %1592 = vmatprep.subr.bf16.mxu0 0
      %1593 = vmatpush1.bf16.msra.mxu0 0
      %1594 = vmatprep.subr.bf16.mxu0 0
      %1595 = vmatpush1.bf16.msra.mxu0 0
      %1596 = vmatprep.subr.bf16.mxu0 0
      %1597 = vmatpush1.bf16.msra.mxu0 0
      %1598 = vmatprep.mubr.bf16.mxu0 0
      %1599 = vmatmul.mubr.bf16.gmra.mrb[0].mxu0 %v1564
      %v1600 = vpop.f32.mrb[0].mxu0
      %v1601 = vadd.f32 0.0, %v1600
      %v1602 = vpop.f32.mrb[0].mxu0
      %v1603 = vpop.f32.mrb[0].mxu0
      %v1604 = vpop.f32.mrb[0].mxu0
      %1605 = vdwg.mxu0
      %1607 = vrot.lane.b32.xlu0 %v1491, 64
      %v1608 = vpop.permute.xlu0 %1607
      %v1610 = vsel %vm510, %v1608, 0
      %1612 = vmatprep.subr.bf16.mxu0 0
      %1613 = vmatpush1.bf16.msra.mxu0 %v646
      %1614 = vmatprep.subr.bf16.mxu0 0
      %1615 = vmatpush1.bf16.msra.mxu0 %v647
      %1616 = vmatprep.subr.bf16.mxu0 0
      %1617 = vmatpush1.bf16.msra.mxu0 0
      %1618 = vmatprep.subr.bf16.mxu0 0
      %1619 = vmatpush1.bf16.msra.mxu0 0
      %1620 = vmatprep.subr.bf16.mxu0 0
      %1621 = vmatpush1.bf16.msra.mxu0 0
      %1622 = vmatprep.subr.bf16.mxu0 0
      %1623 = vmatpush1.bf16.msra.mxu0 0
      %1624 = vmatprep.subr.bf16.mxu0 0
      %1625 = vmatpush1.bf16.msra.mxu0 0
      %1626 = vmatprep.subr.bf16.mxu0 0
      %1627 = vmatpush1.bf16.msra.mxu0 0
      %1628 = vmatprep.subr.bf16.mxu0 0
      %1629 = vmatpush1.bf16.msra.mxu0 0
      %1630 = vmatprep.subr.bf16.mxu0 0
      %1631 = vmatpush1.bf16.msra.mxu0 0
      %1632 = vmatprep.subr.bf16.mxu0 0
      %1633 = vmatpush1.bf16.msra.mxu0 0
      %1634 = vmatprep.subr.bf16.mxu0 0
      %1635 = vmatpush1.bf16.msra.mxu0 0
      %1636 = vmatprep.subr.bf16.mxu0 0
      %1637 = vmatpush1.bf16.msra.mxu0 0
      %1638 = vmatprep.subr.bf16.mxu0 0
      %1639 = vmatpush1.bf16.msra.mxu0 0
      %1640 = vmatprep.subr.bf16.mxu0 0
      %1641 = vmatpush1.bf16.msra.mxu0 0
      %1642 = vmatprep.subr.bf16.mxu0 0
      %1643 = vmatpush1.bf16.msra.mxu0 0
      %1644 = vmatprep.mubr.bf16.mxu0 0
      %1645 = vmatmul.mubr.bf16.gmra.mrb[0].mxu0 %v1610
      %v1646 = vpop.f32.mrb[0].mxu0
      %v1647 = vadd.f32 %v1601, %v1646
      %v1648 = vpop.f32.mrb[0].mxu0
      %v1649 = vpop.f32.mrb[0].mxu0
      %v1650 = vpop.f32.mrb[0].mxu0
      %1651 = vdwg.mxu0
      %v1652 = vadd.f32 %v1647, %v489
      %v1653 = vxor.u32 %v1652, 2147483648
      %v1654 = vmul.f32 %v1653, 1.442695
      %v1655 = vpow.pop %v1654
      %v1656 = vadd.f32 %v1655, 1.0
      %v1657 = vrcp.pop %v1656
      %v1658 = vmul.f32 1.0, %v1657
      %v1659 = vtanh.pop %v1652
      %v1660 = vmul.f32 %v1658, %v1478
      %1662 = vrot.lane.b32.xlu0 %v1659, 64
      %v1663 = vpop.permute.xlu0 %1662
      %v1665 = vmul.f32 %v1658, %v1663
      %1667 = vrot.lane.b32.xlu0 %v1665, 96
      %v1668 = vpop.permute.xlu0 %1667
      %v1670 = vadd.f32 %v1660, %v1668
      %v1671 = vtanh.pop %v1670
      %1673 = vrot.lane.b32.xlu0 %v1671, 64
      %v1674 = vpop.permute.xlu0 %1673
      %v1676 = vmul.f32 %v1658, %v1674
      %1678 = vrot.lane.b32.xlu0 %v1676, 64
      %v1679 = vpop.permute.xlu0 %1678
      %s1681 = scalar_lea.vmem [#allocation7], 40
      %1682 = vst.msk [vmem:[%s1681] sm:$0xff] %vm510, %v1679
      %v1683 = vpack.c.bf16 %v1676, %v1676
      %s1684 = scalar_lea.vmem [#allocation6], 48
      %v1685 = vld [vmem:[%s1684] sm:$0xff]
      %1686 = vmatprep.subr.bf16.mxu0 0
      %1687 = vmatpush1.bf16.msra.mxu0 %v506
      %1688 = vmatprep.subr.bf16.mxu0 0
      %1689 = vmatpush1.bf16.msra.mxu0 %v507
      %1690 = vmatprep.subr.bf16.mxu0 0
      %1691 = vmatpush1.bf16.msra.mxu0 0
      %1692 = vmatprep.subr.bf16.mxu0 0
      %1693 = vmatpush1.bf16.msra.mxu0 0
      %1694 = vmatprep.subr.bf16.mxu0 0
      %1695 = vmatpush1.bf16.msra.mxu0 0
      %1696 = vmatprep.subr.bf16.mxu0 0
      %1697 = vmatpush1.bf16.msra.mxu0 0
      %1698 = vmatprep.subr.bf16.mxu0 0
      %1699 = vmatpush1.bf16.msra.mxu0 0
      %1700 = vmatprep.subr.bf16.mxu0 0
      %1701 = vmatpush1.bf16.msra.mxu0 0
      %1702 = vmatprep.subr.bf16.mxu0 0
      %1703 = vmatpush1.bf16.msra.mxu0 0
      %1704 = vmatprep.subr.bf16.mxu0 0
      %1705 = vmatpush1.bf16.msra.mxu0 0
      %1706 = vmatprep.subr.bf16.mxu0 0
      %1707 = vmatpush1.bf16.msra.mxu0 0
      %1708 = vmatprep.subr.bf16.mxu0 0
      %1709 = vmatpush1.bf16.msra.mxu0 0
      %1710 = vmatprep.subr.bf16.mxu0 0
      %1711 = vmatpush1.bf16.msra.mxu0 0
      %1712 = vmatprep.subr.bf16.mxu0 0
      %1713 = vmatpush1.bf16.msra.mxu0 0
      %1714 = vmatprep.subr.bf16.mxu0 0
      %1715 = vmatpush1.bf16.msra.mxu0 0
      %1716 = vmatprep.subr.bf16.mxu0 0
      %1717 = vmatpush1.bf16.msra.mxu0 0
      %1718 = vmatprep.mubr.bf16.mxu0 0
      %1719 = vmatmul.mubr.bf16.gmra.mrb[0].mxu0 %v1564
      %v1720 = vpop.f32.mrb[0].mxu0
      %v1721 = vadd.f32 0.0, %v1720
      %v1722 = vpop.f32.mrb[0].mxu0
      %v1723 = vpop.f32.mrb[0].mxu0
      %v1724 = vpop.f32.mrb[0].mxu0
      %1725 = vdwg.mxu0
      %v1726 = vadd.f32 %v1685, %v1721
      %v1727 = vxor.u32 %v1726, 2147483648
      %v1728 = vmul.f32 %v1727, 1.442695
      %v1729 = vpow.pop %v1728
      %v1730 = vadd.f32 %v1729, 1.0
      %v1731 = vrcp.pop %v1730
      %v1732 = vmul.f32 1.0, %v1731
      %v1733 = vtanh.pop %v1726
      %v1734 = vmul.f32 %v1732, %v1552
      %1736 = vrot.lane.b32.xlu0 %v1733, 64
      %v1737 = vpop.permute.xlu0 %1736
      %v1739 = vmul.f32 %v1732, %v1737
      %1741 = vrot.lane.b32.xlu0 %v1739, 96
      %v1742 = vpop.permute.xlu0 %1741
      %v1744 = vadd.f32 %v1734, %v1742
      %v1745 = vtanh.pop %v1744
      %1747 = vrot.lane.b32.xlu0 %v1745, 64
      %v1748 = vpop.permute.xlu0 %1747
      %v1750 = vmul.f32 %v1732, %v1748
      %v1751 = vpack.c.bf16 %v1750, %v1750
      %1753 = vrot.lane.b32.xlu0 %v1751, 64
      %v1754 = vpop.permute.xlu0 %1753
      %v1756 = vsel %vm510, %v1754, 0
      %1758 = vmatprep.subr.bf16.mxu0 0
      %1759 = vmatpush1.bf16.msra.mxu0 %v591
      %1760 = vmatprep.subr.bf16.mxu0 0
      %1761 = vmatpush1.bf16.msra.mxu0 %v592
      %1762 = vmatprep.subr.bf16.mxu0 0
      %1763 = vmatpush1.bf16.msra.mxu0 0
      %1764 = vmatprep.subr.bf16.mxu0 0
      %1765 = vmatpush1.bf16.msra.mxu0 0
      %1766 = vmatprep.subr.bf16.mxu0 0
      %1767 = vmatpush1.bf16.msra.mxu0 0
      %1768 = vmatprep.subr.bf16.mxu0 0
      %1769 = vmatpush1.bf16.msra.mxu0 0
      %1770 = vmatprep.subr.bf16.mxu0 0
      %1771 = vmatpush1.bf16.msra.mxu0 0
      %1772 = vmatprep.subr.bf16.mxu0 0
      %1773 = vmatpush1.bf16.msra.mxu0 0
      %1774 = vmatprep.subr.bf16.mxu0 0
      %1775 = vmatpush1.bf16.msra.mxu0 0
      %1776 = vmatprep.subr.bf16.mxu0 0
      %1777 = vmatpush1.bf16.msra.mxu0 0
      %1778 = vmatprep.subr.bf16.mxu0 0
      %1779 = vmatpush1.bf16.msra.mxu0 0
      %1780 = vmatprep.subr.bf16.mxu0 0
      %1781 = vmatpush1.bf16.msra.mxu0 0
      %1782 = vmatprep.subr.bf16.mxu0 0
      %1783 = vmatpush1.bf16.msra.mxu0 0
      %1784 = vmatprep.subr.bf16.mxu0 0
      %1785 = vmatpush1.bf16.msra.mxu0 0
      %1786 = vmatprep.subr.bf16.mxu0 0
      %1787 = vmatpush1.bf16.msra.mxu0 0
      %1788 = vmatprep.subr.bf16.mxu0 0
      %1789 = vmatpush1.bf16.msra.mxu0 0
      %1790 = vmatprep.mubr.bf16.mxu0 0
      %1791 = vmatmul.mubr.bf16.gmra.mrb[0].mxu0 %v1756
      %v1792 = vpop.f32.mrb[0].mxu0
      %v1793 = vadd.f32 0.0, %v1792
      %v1794 = vpop.f32.mrb[0].mxu0
      %v1795 = vpop.f32.mrb[0].mxu0
      %v1796 = vpop.f32.mrb[0].mxu0
      %1797 = vdwg.mxu0
      %1799 = vrot.lane.b32.xlu0 %v1683, 64
      %v1800 = vpop.permute.xlu0 %1799
      %v1802 = vsel %vm510, %v1800, 0
      %1804 = vmatprep.subr.bf16.mxu0 0
      %1805 = vmatpush1.bf16.msra.mxu0 %v646
      %1806 = vmatprep.subr.bf16.mxu0 0
      %1807 = vmatpush1.bf16.msra.mxu0 %v647
      %1808 = vmatprep.subr.bf16.mxu0 0
      %1809 = vmatpush1.bf16.msra.mxu0 0
      %1810 = vmatprep.subr.bf16.mxu0 0
      %1811 = vmatpush1.bf16.msra.mxu0 0
      %1812 = vmatprep.subr.bf16.mxu0 0
      %1813 = vmatpush1.bf16.msra.mxu0 0
      %1814 = vmatprep.subr.bf16.mxu0 0
      %1815 = vmatpush1.bf16.msra.mxu0 0
      %1816 = vmatprep.subr.bf16.mxu0 0
      %1817 = vmatpush1.bf16.msra.mxu0 0
      %1818 = vmatprep.subr.bf16.mxu0 0
      %1819 = vmatpush1.bf16.msra.mxu0 0
      %1820 = vmatprep.subr.bf16.mxu0 0
      %1821 = vmatpush1.bf16.msra.mxu0 0
      %1822 = vmatprep.subr.bf16.mxu0 0
      %1823 = vmatpush1.bf16.msra.mxu0 0
      %1824 = vmatprep.subr.bf16.mxu0 0
      %1825 = vmatpush1.bf16.msra.mxu0 0
      %1826 = vmatprep.subr.bf16.mxu0 0
      %1827 = vmatpush1.bf16.msra.mxu0 0
      %1828 = vmatprep.subr.bf16.mxu0 0
      %1829 = vmatpush1.bf16.msra.mxu0 0
      %1830 = vmatprep.subr.bf16.mxu0 0
      %1831 = vmatpush1.bf16.msra.mxu0 0
      %1832 = vmatprep.subr.bf16.mxu0 0
      %1833 = vmatpush1.bf16.msra.mxu0 0
      %1834 = vmatprep.subr.bf16.mxu0 0
      %1835 = vmatpush1.bf16.msra.mxu0 0
      %1836 = vmatprep.mubr.bf16.mxu0 0
      %1837 = vmatmul.mubr.bf16.gmra.mrb[0].mxu0 %v1802
      %v1838 = vpop.f32.mrb[0].mxu0
      %v1839 = vadd.f32 %v1793, %v1838
      %v1840 = vpop.f32.mrb[0].mxu0
      %v1841 = vpop.f32.mrb[0].mxu0
      %v1842 = vpop.f32.mrb[0].mxu0
      %1843 = vdwg.mxu0
      %v1844 = vadd.f32 %v1839, %v489
      %v1845 = vxor.u32 %v1844, 2147483648
      %v1846 = vmul.f32 %v1845, 1.442695
      %v1847 = vpow.pop %v1846
      %v1848 = vadd.f32 %v1847, 1.0
      %v1849 = vrcp.pop %v1848
      %v1850 = vmul.f32 1.0, %v1849
      %v1851 = vtanh.pop %v1844
      %v1852 = vmul.f32 %v1850, %v1670
      %1854 = vrot.lane.b32.xlu0 %v1851, 64
      %v1855 = vpop.permute.xlu0 %1854
      %v1857 = vmul.f32 %v1850, %v1855
      %1859 = vrot.lane.b32.xlu0 %v1857, 96
      %v1860 = vpop.permute.xlu0 %1859
      %v1862 = vadd.f32 %v1852, %v1860
      %v1863 = vtanh.pop %v1862
      %1865 = vrot.lane.b32.xlu0 %v1863, 64
      %v1866 = vpop.permute.xlu0 %1865
      %v1868 = vmul.f32 %v1850, %v1866
      %1870 = vrot.lane.b32.xlu0 %v1868, 64
      %v1871 = vpop.permute.xlu0 %1870
      %s1873 = scalar_lea.vmem [#allocation7], 48
      %1874 = vst.msk [vmem:[%s1873] sm:$0xff] %vm510, %v1871
      %v1875 = vpack.c.bf16 %v1868, %v1868
      %s1876 = scalar_lea.vmem [#allocation6], 56
      %v1877 = vld [vmem:[%s1876] sm:$0xff]
      %1878 = vmatprep.subr.bf16.mxu0 0
      %1879 = vmatpush1.bf16.msra.mxu0 %v506
      %1880 = vmatprep.subr.bf16.mxu0 0
      %1881 = vmatpush1.bf16.msra.mxu0 %v507
      %1882 = vmatprep.subr.bf16.mxu0 0
      %1883 = vmatpush1.bf16.msra.mxu0 0
      %1884 = vmatprep.subr.bf16.mxu0 0
      %1885 = vmatpush1.bf16.msra.mxu0 0
      %1886 = vmatprep.subr.bf16.mxu0 0
      %1887 = vmatpush1.bf16.msra.mxu0 0
      %1888 = vmatprep.subr.bf16.mxu0 0
      %1889 = vmatpush1.bf16.msra.mxu0 0
      %1890 = vmatprep.subr.bf16.mxu0 0
      %1891 = vmatpush1.bf16.msra.mxu0 0
      %1892 = vmatprep.subr.bf16.mxu0 0
      %1893 = vmatpush1.bf16.msra.mxu0 0
      %1894 = vmatprep.subr.bf16.mxu0 0
      %1895 = vmatpush1.bf16.msra.mxu0 0
      %1896 = vmatprep.subr.bf16.mxu0 0
      %1897 = vmatpush1.bf16.msra.mxu0 0
      %1898 = vmatprep.subr.bf16.mxu0 0
      %1899 = vmatpush1.bf16.msra.mxu0 0
      %1900 = vmatprep.subr.bf16.mxu0 0
      %1901 = vmatpush1.bf16.msra.mxu0 0
      %1902 = vmatprep.subr.bf16.mxu0 0
      %1903 = vmatpush1.bf16.msra.mxu0 0
      %1904 = vmatprep.subr.bf16.mxu0 0
      %1905 = vmatpush1.bf16.msra.mxu0 0
      %1906 = vmatprep.subr.bf16.mxu0 0
      %1907 = vmatpush1.bf16.msra.mxu0 0
      %1908 = vmatprep.subr.bf16.mxu0 0
      %1909 = vmatpush1.bf16.msra.mxu0 0
      %1910 = vmatprep.mubr.bf16.mxu0 0
      %1911 = vmatmul.mubr.bf16.gmra.mrb[0].mxu0 %v1756
      %v1912 = vpop.f32.mrb[0].mxu0
      %v1913 = vadd.f32 0.0, %v1912
      %v1914 = vpop.f32.mrb[0].mxu0
      %v1915 = vpop.f32.mrb[0].mxu0
      %v1916 = vpop.f32.mrb[0].mxu0
      %1917 = vdwg.mxu0
      %v1918 = vadd.f32 %v1877, %v1913
      %v1919 = vxor.u32 %v1918, 2147483648
      %v1920 = vmul.f32 %v1919, 1.442695
      %v1921 = vpow.pop %v1920
      %v1922 = vadd.f32 %v1921, 1.0
      %v1923 = vrcp.pop %v1922
      %v1924 = vmul.f32 1.0, %v1923
      %v1925 = vtanh.pop %v1918
      %v1926 = vmul.f32 %v1924, %v1744
      %1928 = vrot.lane.b32.xlu0 %v1925, 64
      %v1929 = vpop.permute.xlu0 %1928
      %v1931 = vmul.f32 %v1924, %v1929
      %1933 = vrot.lane.b32.xlu0 %v1931, 96
      %v1934 = vpop.permute.xlu0 %1933
      %v1936 = vadd.f32 %v1926, %v1934
      %v1937 = vtanh.pop %v1936
      %1939 = vrot.lane.b32.xlu0 %v1937, 64
      %v1940 = vpop.permute.xlu0 %1939
      %v1942 = vmul.f32 %v1924, %v1940
      %v1943 = vpack.c.bf16 %v1942, %v1942
      %1945 = vrot.lane.b32.xlu0 %v1943, 64
      %v1946 = vpop.permute.xlu0 %1945
      %v1948 = vsel %vm510, %v1946, 0
      %1950 = vmatprep.subr.bf16.mxu0 0
      %1951 = vmatpush1.bf16.msra.mxu0 %v591
      %1952 = vmatprep.subr.bf16.mxu0 0
      %1953 = vmatpush1.bf16.msra.mxu0 %v592
      %1954 = vmatprep.subr.bf16.mxu0 0
      %1955 = vmatpush1.bf16.msra.mxu0 0
      %1956 = vmatprep.subr.bf16.mxu0 0
      %1957 = vmatpush1.bf16.msra.mxu0 0
      %1958 = vmatprep.subr.bf16.mxu0 0
      %1959 = vmatpush1.bf16.msra.mxu0 0
      %1960 = vmatprep.subr.bf16.mxu0 0
      %1961 = vmatpush1.bf16.msra.mxu0 0
      %1962 = vmatprep.subr.bf16.mxu0 0
      %1963 = vmatpush1.bf16.msra.mxu0 0
      %1964 = vmatprep.subr.bf16.mxu0 0
      %1965 = vmatpush1.bf16.msra.mxu0 0
      %1966 = vmatprep.subr.bf16.mxu0 0
      %1967 = vmatpush1.bf16.msra.mxu0 0
      %1968 = vmatprep.subr.bf16.mxu0 0
      %1969 = vmatpush1.bf16.msra.mxu0 0
      %1970 = vmatprep.subr.bf16.mxu0 0
      %1971 = vmatpush1.bf16.msra.mxu0 0
      %1972 = vmatprep.subr.bf16.mxu0 0
      %1973 = vmatpush1.bf16.msra.mxu0 0
      %1974 = vmatprep.subr.bf16.mxu0 0
      %1975 = vmatpush1.bf16.msra.mxu0 0
      %1976 = vmatprep.subr.bf16.mxu0 0
      %1977 = vmatpush1.bf16.msra.mxu0 0
      %1978 = vmatprep.subr.bf16.mxu0 0
      %1979 = vmatpush1.bf16.msra.mxu0 0
      %1980 = vmatprep.subr.bf16.mxu0 0
      %1981 = vmatpush1.bf16.msra.mxu0 0
      %1982 = vmatprep.mubr.bf16.mxu0 0
      %1983 = vmatmul.mubr.bf16.gmra.mrb[0].mxu0 %v1948
      %v1984 = vpop.f32.mrb[0].mxu0
      %v1985 = vadd.f32 0.0, %v1984
      %v1986 = vpop.f32.mrb[0].mxu0
      %v1987 = vpop.f32.mrb[0].mxu0
      %v1988 = vpop.f32.mrb[0].mxu0
      %1989 = vdwg.mxu0
      %1991 = vrot.lane.b32.xlu0 %v1875, 64
      %v1992 = vpop.permute.xlu0 %1991
      %v1994 = vsel %vm510, %v1992, 0
      %1996 = vmatprep.subr.bf16.mxu0 0
      %1997 = vmatpush1.bf16.msra.mxu0 %v646
      %1998 = vmatprep.subr.bf16.mxu0 0
      %1999 = vmatpush1.bf16.msra.mxu0 %v647
      %2000 = vmatprep.subr.bf16.mxu0 0
      %2001 = vmatpush1.bf16.msra.mxu0 0
      %2002 = vmatprep.subr.bf16.mxu0 0
      %2003 = vmatpush1.bf16.msra.mxu0 0
      %2004 = vmatprep.subr.bf16.mxu0 0
      %2005 = vmatpush1.bf16.msra.mxu0 0
      %2006 = vmatprep.subr.bf16.mxu0 0
      %2007 = vmatpush1.bf16.msra.mxu0 0
      %2008 = vmatprep.subr.bf16.mxu0 0
      %2009 = vmatpush1.bf16.msra.mxu0 0
      %2010 = vmatprep.subr.bf16.mxu0 0
      %2011 = vmatpush1.bf16.msra.mxu0 0
      %2012 = vmatprep.subr.bf16.mxu0 0
      %2013 = vmatpush1.bf16.msra.mxu0 0
      %2014 = vmatprep.subr.bf16.mxu0 0
      %2015 = vmatpush1.bf16.msra.mxu0 0
      %2016 = vmatprep.subr.bf16.mxu0 0
      %2017 = vmatpush1.bf16.msra.mxu0 0
      %2018 = vmatprep.subr.bf16.mxu0 0
      %2019 = vmatpush1.bf16.msra.mxu0 0
      %2020 = vmatprep.subr.bf16.mxu0 0
      %2021 = vmatpush1.bf16.msra.mxu0 0
      %2022 = vmatprep.subr.bf16.mxu0 0
      %2023 = vmatpush1.bf16.msra.mxu0 0
      %2024 = vmatprep.subr.bf16.mxu0 0
      %2025 = vmatpush1.bf16.msra.mxu0 0
      %2026 = vmatprep.subr.bf16.mxu0 0
      %2027 = vmatpush1.bf16.msra.mxu0 0
      %2028 = vmatprep.mubr.bf16.mxu0 0
      %2029 = vmatmul.mubr.bf16.gmra.mrb[0].mxu0 %v1994
      %v2030 = vpop.f32.mrb[0].mxu0
      %v2031 = vadd.f32 %v1985, %v2030
      %v2032 = vpop.f32.mrb[0].mxu0
      %v2033 = vpop.f32.mrb[0].mxu0
      %v2034 = vpop.f32.mrb[0].mxu0
      %2035 = vdwg.mxu0
      %v2036 = vadd.f32 %v2031, %v489
      %v2037 = vxor.u32 %v2036, 2147483648
      %v2038 = vmul.f32 %v2037, 1.442695
      %v2039 = vpow.pop %v2038
      %v2040 = vadd.f32 %v2039, 1.0
      %v2041 = vrcp.pop %v2040
      %v2042 = vmul.f32 1.0, %v2041
      %v2043 = vtanh.pop %v2036
      %v2044 = vmul.f32 %v2042, %v1862
      %2046 = vrot.lane.b32.xlu0 %v2043, 64
      %v2047 = vpop.permute.xlu0 %2046
      %v2049 = vmul.f32 %v2042, %v2047
      %2051 = vrot.lane.b32.xlu0 %v2049, 96
      %v2052 = vpop.permute.xlu0 %2051
      %v2054 = vadd.f32 %v2044, %v2052
      %v2055 = vtanh.pop %v2054
      %2057 = vrot.lane.b32.xlu0 %v2055, 64
      %v2058 = vpop.permute.xlu0 %2057
      %v2060 = vmul.f32 %v2042, %v2058
      %2062 = vrot.lane.b32.xlu0 %v2060, 64
      %v2063 = vpop.permute.xlu0 %2062
      %s2065 = scalar_lea.vmem [#allocation7], 56
      %2066 = vst.msk [vmem:[%s2065] sm:$0xff] %vm510, %v2063
      %2068 = vrot.lane.b32.xlu0 %v1942, 64
      %v2069 = vpop.permute.xlu0 %2068
      %2071 = vst.msk [vmem:[#allocation2] sm:$0xff] %vm510, %v2069
      %2072 = vst.msk [vmem:[#allocation3] sm:$0xff] %vm510, %v1936
      %2073 = vst.msk [vmem:[#allocation4] sm:$0xff] %vm510, %v2063
      %2074 = vst.msk [vmem:[#allocation5] sm:$0xff] %vm510, %v2054
      %v2075 = vld [vmem:[#allocation7] sm:$0xff]
      %v2076 = vld [vmem:[#allocation7 + $0x8] sm:$0xff]
      %v2077 = vld [vmem:[#allocation7 + $0x10] sm:$0xff]
      %v2078 = vld [vmem:[#allocation7 + $0x18] sm:$0xff]
      %v2079 = vld [vmem:[#allocation7 + $0x20] sm:$0xff]
      %v2080 = vld [vmem:[#allocation7 + $0x28] sm:$0xff]
      %v2081 = vld [vmem:[#allocation7 + $0x30] sm:$0xff]
      %v2082 = vld [vmem:[#allocation7 + $0x38] sm:$0xff]
      %v2083 = vpack.c.bf16 %v2076, %v2075
      %v2084 = vpack.c.bf16 %v2078, %v2077
      %v2085 = vpack.c.bf16 %v2080, %v2079
      %v2086 = vpack.c.bf16 %v2082, %v2081
      %v2087 = vld [vmem:[%s7] sm:$0xf]
      %v2088 = vld [vmem:[%s7 + $0x4] sm:$0xf]
      %v2089 = vld [vmem:[%s7 + $0x8] sm:$0xf]
      %v2090 = vld [vmem:[%s7 + $0xc] sm:$0xf]
      %v2091 = vld [vmem:[%s8] sm:$0x1]
      %v2093 = vlaneseq
      %v2094 = vshrl.u32 %v2093, 7
      %v2095 = vsub.s32 0, %v2094
      %v2096 = vrot.slane %v2091, %v2095
      %v2102 = vunpack.c.l.b16 %v2087
      %v2103 = vunpack.c.l.b16 %v2088
      %v2104 = vunpack.c.l.b16 %v2089
      %v2105 = vunpack.c.l.b16 %v2090
      %v2106 = vpack.c.b16 %v2103, %v2102
      %v2107 = vpack.c.b16 %v2105, %v2104
      %v2111 = vsel %vm510, %v2083, 0
      %v2114 = vsel %vm510, %v2084, 0
      %v2117 = vsel %vm510, %v2085, 0
      %v2120 = vsel %vm510, %v2086, 0
      %2122 = vmatprep.subr.bf16.mxu0 0
      %2123 = vmatpush1.bf16.msra.mxu0 %v2106
      %2124 = vmatprep.subr.bf16.mxu0 0
      %2125 = vmatpush1.bf16.msra.mxu0 %v2107
      %2126 = vmatprep.subr.bf16.mxu0 0
      %2127 = vmatpush1.bf16.msra.mxu0 0
      %2128 = vmatprep.subr.bf16.mxu0 0
      %2129 = vmatpush1.bf16.msra.mxu0 0
      %2130 = vmatprep.subr.bf16.mxu0 0
      %2131 = vmatpush1.bf16.msra.mxu0 0
      %2132 = vmatprep.subr.bf16.mxu0 0
      %2133 = vmatpush1.bf16.msra.mxu0 0
      %2134 = vmatprep.subr.bf16.mxu0 0
      %2135 = vmatpush1.bf16.msra.mxu0 0
      %2136 = vmatprep.subr.bf16.mxu0 0
      %2137 = vmatpush1.bf16.msra.mxu0 0
      %2138 = vmatprep.subr.bf16.mxu0 0
      %2139 = vmatpush1.bf16.msra.mxu0 0
      %2140 = vmatprep.subr.bf16.mxu0 0
      %2141 = vmatpush1.bf16.msra.mxu0 0
      %2142 = vmatprep.subr.bf16.mxu0 0
      %2143 = vmatpush1.bf16.msra.mxu0 0
      %2144 = vmatprep.subr.bf16.mxu0 0
      %2145 = vmatpush1.bf16.msra.mxu0 0
      %2146 = vmatprep.subr.bf16.mxu0 0
      %2147 = vmatpush1.bf16.msra.mxu0 0
      %2148 = vmatprep.subr.bf16.mxu0 0
      %2149 = vmatpush1.bf16.msra.mxu0 0
      %2150 = vmatprep.subr.bf16.mxu0 0
      %2151 = vmatpush1.bf16.msra.mxu0 0
      %2152 = vmatprep.subr.bf16.mxu0 0
      %2153 = vmatpush1.bf16.msra.mxu0 0
      %2154 = vmatprep.mubr.bf16.mxu0 0
      %2155 = vmatmul.mubr.bf16.gmra.mrb[0].mxu0 %v2111
      %v2156 = vpop.f32.mrb[0].mxu0
      %v2157 = vadd.f32 %v2096, %v2156
      %v2158 = vpop.f32.mrb[0].mxu0
      %v2159 = vpop.f32.mrb[0].mxu0
      %v2160 = vadd.f32 %v2096, %v2159
      %v2161 = vpop.f32.mrb[0].mxu0
      %2162 = vmatprep.mubr.bf16.mxu0 0
      %2163 = vmatmul.mubr.bf16.gmra.mrb[0].mxu0 %v2114
      %v2164 = vpop.f32.mrb[0].mxu0
      %v2165 = vadd.f32 %v2096, %v2164
      %v2166 = vpop.f32.mrb[0].mxu0
      %v2167 = vpop.f32.mrb[0].mxu0
      %v2168 = vadd.f32 %v2096, %v2167
      %v2169 = vpop.f32.mrb[0].mxu0
      %2170 = vmatprep.mubr.bf16.mxu0 0
      %2171 = vmatmul.mubr.bf16.gmra.mrb[0].mxu0 %v2117
      %v2172 = vpop.f32.mrb[0].mxu0
      %v2173 = vadd.f32 %v2096, %v2172
      %v2174 = vpop.f32.mrb[0].mxu0
      %v2175 = vpop.f32.mrb[0].mxu0
      %v2176 = vadd.f32 %v2096, %v2175
      %v2177 = vpop.f32.mrb[0].mxu0
      %2178 = vmatprep.mubr.bf16.mxu0 0
      %2179 = vmatmul.mubr.bf16.gmra.mrb[0].mxu0 %v2120
      %v2180 = vpop.f32.mrb[0].mxu0
      %v2181 = vadd.f32 %v2096, %v2180
      %v2182 = vpop.f32.mrb[0].mxu0
      %v2183 = vpop.f32.mrb[0].mxu0
      %v2184 = vadd.f32 %v2096, %v2183
      %v2185 = vpop.f32.mrb[0].mxu0
      %2186 = vdwg.mxu0
      %2187 = vst [vmem:[%s334] sm:$0xff] %v2157
      %2188 = vst [vmem:[%s334 + $0x8] sm:$0xff] %v2160
      %2189 = vst [vmem:[%s334 + $0x10] sm:$0xff] %v2165
      %2190 = vst [vmem:[%s334 + $0x18] sm:$0xff] %v2168
      %2191 = vst [vmem:[%s334 + $0x20] sm:$0xff] %v2173
      %2192 = vst [vmem:[%s334 + $0x28] sm:$0xff] %v2176
      %2193 = vst [vmem:[%s334 + $0x30] sm:$0xff] %v2181
      %2194 = vst [vmem:[%s334 + $0x38] sm:$0xff] %v2184
      %s2195 = smul.u32 8, %s20
      %p2196 = scmp.lt.s32.totalorder %s2195, 15
      %s2197 = scalar_select %p2196, %s2195, 15
      %s2198 = smul.addr %s2197, 8
      %s2199 = scalar_lea.vmem %s9, %s2198
      // Predicated region
      $region61: #{_lambda_.1} parent=55 // pred_check
        %p2200 = pneg %p232
      $region62: #{_lambda_.1} parent=55 // pred_check_branch
        %2202 = sbr.rel (%p2200) target = $region64
      $region63: #{_lambda_.1} parent=55 // pred_region
        %s2203 = smul.u32 8, %s20
      $region64: #{_lambda_.1} parent=55 // pred_fallthru
        _
    $region56: #{_lambda_.1} parent=5 // pred_fallthru
      _
    %p2204 = scmp.le.s32.totalorder 2, %s15
    // Predicated region
    $region65: #{_lambda_.1} parent=5 // pred_check
      %p2205 = pneg %p2204
    $region66: #{_lambda_.1} parent=5 // pred_check_branch
      %2207 = sbr.rel (%p2205) target = $region68
    $region67: #{_lambda_.1} parent=5 // pred_region
      %s2208 = ssub.s32 %s15, 2
      // Predicated region
      $region69: #{_lambda_.1} parent=67 // pred_check
        %p2209 = pneg %p238
      $region70: #{_lambda_.1} parent=67 // pred_check_branch
        %2211 = sbr.rel (%p2209) target = $region72
      $region71: #{_lambda_.1} parent=67 // pred_region
        %s2212 = smul.u32 8, %s21
        %p2213 = scmp.lt.s32.totalorder %s2212, 15
        %s2214 = scalar_select %p2213, %s2212, 15
        %s2215 = smul.addr %s2214, 8
        %s2216 = scalar_lea.vmem %s9, %s2215
      $region72: #{_lambda_.1} parent=67 // pred_fallthru
        _
    $region68: #{_lambda_.1} parent=5 // pred_fallthru
      _
  $region6: #{_lambda_.1} parent=0 // loop_footer
    %s19 = sadd.s32 1, %s15
  $region7: #{_lambda_.1} parent=0 // loop_footer_branch
    %14 = sbr.rel target = $region3
  $region8: #{_lambda_.1} parent=0 // loop_exit
    _

</llo_original>
